<compile_context>
chip_gen: v7x
topology: tpu7x:2x2x1
jax: 0.10.0
libtpu: 0.0.40
codegen_flags: <defaults>
</compile_context>

<pallas_src>
import jax
import jax.numpy as jnp
from jax.experimental import pallas as pl
from jax.experimental.pallas import tpu as pltpu


# ----------------------------------------------------------------------------
# Generation-aware hardware queries (defensive: fall back to safe defaults).
# ----------------------------------------------------------------------------
def _vmem_capacity_bytes(default=64 << 20):
    """Physical VMEM per TensorCore (64 MiB on v7x, 128 MiB on v5e/v6e)."""
    try:
        cap = int(pltpu.get_tpu_info().vmem_capacity_bytes)
        if cap > 0:
            return cap
    except Exception:
        pass
    return default          # conservative (v7x per-core) fallback


def _tensorcore_count(default=1):
    """TensorCores per chip (2 on v7x megacore, 1 on v5e/v6e)."""
    try:
        info = pltpu.get_tpu_info()
        for attr in ("num_tensorcores", "tensorcore_count", "num_cores",
                     "core_count", "cores_per_chip"):
            v = getattr(info, attr, None)
            if isinstance(v, int) and 0 < v <= 16:
                return v
    except Exception:
        pass
    return default


# ----------------------------------------------------------------------------
# Kernel
# ----------------------------------------------------------------------------
def _tversky_kernel(x_ref, lbl_ref, tp_ref, sp_ref, st_ref,
                    tp_acc, sp_acc, st_acc):
    ni = pl.program_id(1)        # batch axis
    hwi = pl.program_id(2)       # spatial-tile axis within this split
    c = x_ref.shape[1]

    # Zero this split's lane-wide accumulators at the start of its work.
    @pl.when(jnp.logical_and(ni == 0, hwi == 0))
    def _init():
        tp_acc[...] = jnp.zeros_like(tp_acc)
        sp_acc[...] = jnp.zeros_like(sp_acc)
        st_acc[...] = jnp.zeros_like(st_acc)

    lbl = lbl_ref[0, 0]                                          # (S, L) int32
    xs = [x_ref[0, ci].astype(jnp.float32) for ci in range(c)]   # C x (S, L)

    # Per-pixel softmax over the class axis: C-1 full-width max / add ops (VPU).
    m = xs[0]
    for ci in range(1, c):
        m = jnp.maximum(m, xs[ci])
    es = [jnp.exp(x - m) for x in xs]
    denom = es[0]
    for ci in range(1, c):
        denom = denom + es[ci]

    # EUP approximate reciprocal + one Newton step (no VPU divide, f32-accurate).
    r = pl.reciprocal(denom, approx=True)
    r = r * (2.0 - denom * r)
    # Padded pixels carry label -1: zero their reciprocal so they contribute
    # exactly nothing to any sum (single cheap (S, L) compare + select).
    r = jnp.where(lbl >= 0, r, 0.0)

    # Pure element-wise accumulation into lane-wide partial sums.  The single
    # (lbl == ci) compare is reused for both tp and st (no one-hot tensor).
    for ci in range(c):
        p = es[ci] * r                       # softmax prob of class ci (0 at pads)
        hit = lbl == ci
        tp_acc[ci] += jnp.where(hit, p, 0.0)
        sp_acc[ci] += p
        st_acc[ci] += jnp.where(hit, 1.0, 0.0)

    # Once per split: sublane-reduce the accumulators (otherwise-idle XLU) and
    # write the small (C, 1, L) partial sums back to HBM.
    @pl.when(jnp.logical_and(ni == pl.num_programs(1) - 1,
                             hwi == pl.num_programs(2) - 1))
    def _finalize():
        for ci in range(c):
            tp_ref[0, ci] = jnp.sum(tp_acc[ci], axis=0, keepdims=True)
            sp_ref[0, ci] = jnp.sum(sp_acc[ci], axis=0, keepdims=True)
            st_ref[0, ci] = jnp.sum(st_acc[ci], axis=0, keepdims=True)


# ----------------------------------------------------------------------------
# Wrapper
# ----------------------------------------------------------------------------
def tversky_loss(inputs, target, *, alpha=0.3, beta=0.7, smooth=1e-5,
                 max_tile_px=1 << 18, lane_width=512, num_splits=None):
    """Tversky loss matching Tversky_loss.forward (alpha=0.3, beta=0.7, smooth=1e-5).

    `inputs` is NCHW logits (f32 or bf16); `target` is (N, H, W) integer labels
    in [0, C).  The NCHW layout is read directly (no wrapper transpose); the
    spatial axis is packed into a (rows, lanes) plane so the kernel runs at
    full vreg occupancy even for small class counts.
    """
    n, c, h, w = inputs.shape
    assert target.shape == (n, h, w), (inputs.shape, target.shape)
    hw = h * w
    itemsize = jnp.dtype(inputs.dtype).itemsize

    # ---- generation-aware sizing -------------------------------------------
    vmem_cap = _vmem_capacity_bytes()
    vmem_budget = (vmem_cap * 5) // 8           # ~40 MiB on v7x, ~80 MiB on v5e/v6e

    # Lane width of the packed spatial layout (multiple of 128).
    L = max(128, min(int(lane_width) // 128 * 128, (hw + 127) // 128 * 128))
    # Sublane multiple that keeps the logits dtype fully packed (8 f32 / 16 bf16).
    sub = max(8, 32 // itemsize)

    # Per-pixel VMEM: double-buffered logits + int32 labels + 3 f32 accumulators.
    per_px = 2 * c * itemsize + 2 * 4 + 3 * c * 4
    budget_px = max(sub * L, min(vmem_budget // per_px, int(max_tile_px)))

    r_real = pl.cdiv(hw, L)                              # real rows of the (R, L) layout
    s_max = max(sub, (budget_px // L) // sub * sub)      # rows per tile the budget allows

    # One split per TensorCore (megacore on v7x), clamped so every split gets
    # at least one row-tile of real work.
    if num_splits is None:
        num_splits = _tensorcore_count()
    num_splits = max(1, min(int(num_splits), pl.cdiv(r_real, sub)))

    # Balanced spatial tiling whose tile count is an exact multiple of the
    # split count: no ghost tiles, no in-kernel index clamping.
    n_sp_tiles = pl.cdiv(r_real, s_max)
    n_sp_tiles = pl.cdiv(n_sp_tiles, num_splits) * num_splits
    s_tile = pl.cdiv(pl.cdiv(r_real, n_sp_tiles), sub) * sub
    r_pad = s_tile * n_sp_tiles
    hw_pad = r_pad * L
    tiles_per_split = n_sp_tiles // num_splits

    # ---- free reshapes (one pad pass only if HW is ragged) ------------------
    x = inputs.reshape(n, c, hw)
    lbl = target.reshape(n, 1, hw).astype(jnp.int32)
    # TODO(synk): accept int8/int16 labels end-to-end (cuts label HBM traffic on
    # v5e) once producers emit them; int32 keeps the layout simplest here.
    if hw_pad != hw:
        x = jnp.pad(x, ((0, 0), (0, 0), (0, hw_pad - hw)))
        lbl = jnp.pad(lbl, ((0, 0), (0, 0), (0, hw_pad - hw)), constant_values=-1)
    x = x.reshape(n, c, r_pad, L)
    lbl = lbl.reshape(n, 1, r_pad, L)

    # ---- grid & specs --------------------------------------------------------
    def in_map(s, ni, hwi):
        return (ni, 0, s * tiles_per_split + hwi, 0)

    def out_map(s, ni, hwi):
        return (s, 0, 0, 0)

    part_shape = jax.ShapeDtypeStruct((num_splits, c, 1, L), jnp.float32)
    part_spec = pl.BlockSpec((1, c, 1, L), out_map)

    tile_px = s_tile * L
    vmem_need = (2 * c * tile_px * itemsize      # logits, double buffered
                 + 2 * tile_px * 4               # labels, double buffered
                 + 3 * c * tile_px * 4           # resident f32 accumulators
                 + 3 * 2 * c * L * 4)            # small partial-sum outputs
    vmem_limit = int(min(max(vmem_need + (4 << 20), 32 << 20),
                         (vmem_cap * 7) // 8))

    tp_p, sp_p, st_p = pl.pallas_call(
        _tversky_kernel,
        out_shape=(part_shape, part_shape, part_shape),
        grid_spec=pltpu.PrefetchScalarGridSpec(
            num_scalar_prefetch=0,
            grid=(num_splits, n, tiles_per_split),
            in_specs=[
                pl.BlockSpec((1, c, s_tile, L), in_map),   # logits (N, C, R, L)
                pl.BlockSpec((1, 1, s_tile, L), in_map),   # labels (N, 1, R, L)
            ],
            out_specs=(part_spec, part_spec, part_spec),
            scratch_shapes=[pltpu.VMEM((c, s_tile, L), jnp.float32)] * 3,
        ),
        compiler_params=pltpu.CompilerParams(
            dimension_semantics=("parallel", "arbitrary", "arbitrary"),
            vmem_limit_bytes=vmem_limit),
    )(x, lbl)

    # ---- tiny XLA epilogue: reduce the small partials and form the loss -----
    tp = jnp.sum(tp_p, axis=(0, 2, 3))
    sp = jnp.sum(sp_p, axis=(0, 2, 3))
    st = jnp.sum(st_p, axis=(0, 2, 3))
    fp = sp - tp
    fn = st - tp
    tversky = (tp + smooth) / (tp + alpha * fp + beta * fn + smooth)
    return 1.0 - jnp.mean(tversky)


# ----------------------------------------------------------------------------
# Pure-JAX reference (mirrors the PyTorch forward).
# ----------------------------------------------------------------------------
def _tversky_loss_ref(inputs, target, *, alpha=0.3, beta=0.7, smooth=1e-5):
    n, c, h, w = inputs.shape
    onehot = jax.nn.one_hot(target, c, dtype=jnp.float32).reshape(n, -1, c)
    p = jax.nn.softmax(
        jnp.transpose(inputs, (0, 2, 3, 1)).reshape(n, -1, c).astype(jnp.float32),
        axis=-1)
    tp = jnp.sum(onehot * p, axis=(0, 1))
    fp = jnp.sum(p, axis=(0, 1)) - tp
    fn = jnp.sum(onehot, axis=(0, 1)) - tp
    tversky = (tp + smooth) / (tp + alpha * fp + beta * fn + smooth)
    return 1.0 - jnp.mean(tversky)


if __name__ == "__main__":
    key = jax.random.PRNGKey(0)

    def _check(n, c, h, w, dtype=jnp.float32, tol=1e-4, **kw):
        k1, k2 = jax.random.split(
            jax.random.fold_in(key, n * 1000000 + c * 10000 + h * 100 + w))
        logits = jax.random.normal(k1, (n, c, h, w), dtype=jnp.float32).astype(dtype)
        labels = jax.random.randint(k2, (n, h, w), 0, c, dtype=jnp.int32)
        out = jax.block_until_ready(tversky_loss(logits, labels, **kw))
        ref = _tversky_loss_ref(logits.astype(jnp.float32), labels)
        assert jnp.allclose(out, ref, atol=tol, rtol=tol), (
            out, ref, (n, c, h, w), dtype, kw)

    _check(2, 4, 16, 16)                                     # single tile
    _check(2, 4, 10, 10)                                     # ragged HW -> pad + mask
    _check(2, 4, 40, 40, max_tile_px=1024, lane_width=128)   # multiple spatial tiles
    _check(2, 4, 48, 48, max_tile_px=1024, lane_width=128,
           num_splits=2)                                     # 2 parallel splits, no ghosts
    _check(1, 3, 16, 16)                                     # odd class count
    _check(2, 4, 16, 16, dtype=jnp.bfloat16, tol=1e-3)       # bf16 logits path
    print("KERNEL_OK")
</pallas_src>

<mosaic_0001>
module attributes {stable_mosaic.version = 11 : i64} {
  func.func @_tversky_kernel(%arg0: i32, %arg1: i32, %arg2: i32, %arg3: memref<1x4x8x256xf32, #tpu.memory_space<vmem>>, %arg4: memref<1x1x8x256xi32, #tpu.memory_space<vmem>>, %arg5: memref<1x4x1x256xf32, #tpu.memory_space<vmem>>, %arg6: memref<1x4x1x256xf32, #tpu.memory_space<vmem>>, %arg7: memref<1x4x1x256xf32, #tpu.memory_space<vmem>>, %arg8: memref<4x8x256xf32, #tpu.memory_space<vmem>>, %arg9: memref<4x8x256xf32, #tpu.memory_space<vmem>>, %arg10: memref<4x8x256xf32, #tpu.memory_space<vmem>>) attributes {dimension_semantics = [#tpu.dimension_semantics<parallel>, #tpu.dimension_semantics<arbitrary>, #tpu.dimension_semantics<arbitrary>], iteration_bounds = array<i64: 1, 2, 1>, scalar_prefetch = 0 : i64, scratch_operands = 3 : i64, tpu.core_type = #tpu.core_type<tc>, window_params = [{transform_indices = @transform_0, window_bounds = array<i64: 1, 4, 8, 256>}, {transform_indices = @transform_1, window_bounds = array<i64: 1, 1, 8, 256>}, {transform_indices = @transform_2, window_bounds = array<i64: 1, 4, 1, 256>}, {transform_indices = @transform_3, window_bounds = array<i64: 1, 4, 1, 256>}, {transform_indices = @transform_4, window_bounds = array<i64: 1, 4, 1, 256>}]} {
    %c0_i32 = arith.constant 0 : i32
    %0 = arith.cmpi eq, %arg1, %c0_i32 : i32
    %c0_i32_0 = arith.constant 0 : i32
    %1 = arith.cmpi eq, %arg2, %c0_i32_0 : i32
    %2 = arith.andi %0, %1 : i1
    %3 = arith.extui %2 : i1 to i32
    %c0_i32_1 = arith.constant 0 : i32
    %4 = arith.cmpi ne, %3, %c0_i32_1 : i32
    scf.if %4 {
      %cst_108 = arith.constant 0.000000e+00 : f32
      %147 = vector.broadcast %cst_108 : f32 to vector<4x8x256xf32>
      %c0_109 = arith.constant 0 : index
      %c0_110 = arith.constant 0 : index
      %c0_111 = arith.constant 0 : index
      %148 = vector.load %arg8[%c0_109, %c0_110, %c0_111] : memref<4x8x256xf32, #tpu.memory_space<vmem>>, vector<4x8x256xf32>
      tpu.vector_store %arg8[%c0_109, %c0_110, %c0_111], %147 {strides = array<i32>} : memref<4x8x256xf32, #tpu.memory_space<vmem>>, vector<4x8x256xf32>,
      %cst_112 = arith.constant 0.000000e+00 : f32
      %149 = vector.broadcast %cst_112 : f32 to vector<4x8x256xf32>
      %c0_113 = arith.constant 0 : index
      %c0_114 = arith.constant 0 : index
      %c0_115 = arith.constant 0 : index
      %150 = vector.load %arg9[%c0_113, %c0_114, %c0_115] : memref<4x8x256xf32, #tpu.memory_space<vmem>>, vector<4x8x256xf32>
      tpu.vector_store %arg9[%c0_113, %c0_114, %c0_115], %149 {strides = array<i32>} : memref<4x8x256xf32, #tpu.memory_space<vmem>>, vector<4x8x256xf32>,
      %cst_116 = arith.constant 0.000000e+00 : f32
      %151 = vector.broadcast %cst_116 : f32 to vector<4x8x256xf32>
      %c0_117 = arith.constant 0 : index
      %c0_118 = arith.constant 0 : index
      %c0_119 = arith.constant 0 : index
      %152 = vector.load %arg10[%c0_117, %c0_118, %c0_119] : memref<4x8x256xf32, #tpu.memory_space<vmem>>, vector<4x8x256xf32>
      tpu.vector_store %arg10[%c0_117, %c0_118, %c0_119], %151 {strides = array<i32>} : memref<4x8x256xf32, #tpu.memory_space<vmem>>, vector<4x8x256xf32>,
    } else {
    }
    %c0 = arith.constant 0 : index
    %c0_2 = arith.constant 0 : index
    %c0_3 = arith.constant 0 : index
    %c0_4 = arith.constant 0 : index
    %5 = vector.load %arg4[%c0, %c0_2, %c0_3, %c0_4] : memref<1x1x8x256xi32, #tpu.memory_space<vmem>>, vector<1x1x8x256xi32>
    %6 = vector.shape_cast %5 : vector<1x1x8x256xi32> to vector<8x256xi32>
    %c0_5 = arith.constant 0 : index
    %c0_6 = arith.constant 0 : index
    %c0_7 = arith.constant 0 : index
    %c0_8 = arith.constant 0 : index
    %7 = vector.load %arg3[%c0_5, %c0_6, %c0_7, %c0_8] : memref<1x4x8x256xf32, #tpu.memory_space<vmem>>, vector<1x1x8x256xf32>
    %8 = vector.shape_cast %7 : vector<1x1x8x256xf32> to vector<8x256xf32>
    %c0_9 = arith.constant 0 : index
    %c1 = arith.constant 1 : index
    %c0_10 = arith.constant 0 : index
    %c0_11 = arith.constant 0 : index
    %9 = vector.load %arg3[%c0_9, %c1, %c0_10, %c0_11] : memref<1x4x8x256xf32, #tpu.memory_space<vmem>>, vector<1x1x8x256xf32>
    %10 = vector.shape_cast %9 : vector<1x1x8x256xf32> to vector<8x256xf32>
    %c0_12 = arith.constant 0 : index
    %c2 = arith.constant 2 : index
    %c0_13 = arith.constant 0 : index
    %c0_14 = arith.constant 0 : index
    %11 = vector.load %arg3[%c0_12, %c2, %c0_13, %c0_14] : memref<1x4x8x256xf32, #tpu.memory_space<vmem>>, vector<1x1x8x256xf32>
    %12 = vector.shape_cast %11 : vector<1x1x8x256xf32> to vector<8x256xf32>
    %c0_15 = arith.constant 0 : index
    %c3 = arith.constant 3 : index
    %c0_16 = arith.constant 0 : index
    %c0_17 = arith.constant 0 : index
    %13 = vector.load %arg3[%c0_15, %c3, %c0_16, %c0_17] : memref<1x4x8x256xf32, #tpu.memory_space<vmem>>, vector<1x1x8x256xf32>
    %14 = vector.shape_cast %13 : vector<1x1x8x256xf32> to vector<8x256xf32>
    %15 = arith.maximumf %8, %10 : vector<8x256xf32>
    %16 = arith.maximumf %15, %12 : vector<8x256xf32>
    %17 = arith.maximumf %16, %14 : vector<8x256xf32>
    %18 = arith.subf %8, %17 : vector<8x256xf32>
    %19 = math.exp %18 : vector<8x256xf32>
    %20 = arith.subf %10, %17 : vector<8x256xf32>
    %21 = math.exp %20 : vector<8x256xf32>
    %22 = arith.subf %12, %17 : vector<8x256xf32>
    %23 = math.exp %22 : vector<8x256xf32>
    %24 = arith.subf %14, %17 : vector<8x256xf32>
    %25 = math.exp %24 : vector<8x256xf32>
    %26 = arith.addf %19, %21 : vector<8x256xf32>
    %27 = arith.addf %26, %23 : vector<8x256xf32>
    %28 = arith.addf %27, %25 : vector<8x256xf32>
    %29 = tpu.reciprocal %28 {approx = true} : vector<8x256xf32> -> vector<8x256xf32>
    %30 = arith.mulf %28, %29 : vector<8x256xf32>
    %cst = arith.constant 2.000000e+00 : f32
    %31 = vector.broadcast %cst : f32 to vector<8x256xf32>
    %32 = arith.subf %31, %30 : vector<8x256xf32>
    %33 = arith.mulf %29, %32 : vector<8x256xf32>
    %c0_i32_18 = arith.constant 0 : i32
    %34 = vector.broadcast %c0_i32_18 : i32 to vector<8x256xi32>
    %35 = arith.cmpi sge, %6, %34 : vector<8x256xi32>
    %cst_19 = arith.constant 0.000000e+00 : f32
    %36 = vector.broadcast %cst_19 : f32 to vector<8x256xf32>
    %37 = arith.select %35, %33, %36 : vector<8x256xi1>, vector<8x256xf32>
    %38 = arith.mulf %19, %37 : vector<8x256xf32>
    %c0_i32_20 = arith.constant 0 : i32
    %39 = vector.broadcast %c0_i32_20 : i32 to vector<8x256xi32>
    %40 = arith.cmpi eq, %6, %39 : vector<8x256xi32>
    %c0_21 = arith.constant 0 : index
    %c0_22 = arith.constant 0 : index
    %c0_23 = arith.constant 0 : index
    %41 = vector.load %arg8[%c0_21, %c0_22, %c0_23] : memref<4x8x256xf32, #tpu.memory_space<vmem>>, vector<1x8x256xf32>
    %42 = vector.shape_cast %41 : vector<1x8x256xf32> to vector<8x256xf32>
    %cst_24 = arith.constant 0.000000e+00 : f32
    %43 = vector.broadcast %cst_24 : f32 to vector<8x256xf32>
    %44 = arith.select %40, %38, %43 : vector<8x256xi1>, vector<8x256xf32>
    %45 = arith.addf %42, %44 : vector<8x256xf32>
    %c0_25 = arith.constant 0 : index
    %c0_26 = arith.constant 0 : index
    %c0_27 = arith.constant 0 : index
    %46 = vector.load %arg8[%c0_25, %c0_26, %c0_27] : memref<4x8x256xf32, #tpu.memory_space<vmem>>, vector<1x8x256xf32>
    %47 = vector.shape_cast %46 : vector<1x8x256xf32> to vector<8x256xf32>
    %48 = vector.shape_cast %45 : vector<8x256xf32> to vector<1x8x256xf32>
    tpu.vector_store %arg8[%c0_25, %c0_26, %c0_27], %48 {strides = array<i32>} : memref<4x8x256xf32, #tpu.memory_space<vmem>>, vector<1x8x256xf32>,
    %c0_28 = arith.constant 0 : index
    %c0_29 = arith.constant 0 : index
    %c0_30 = arith.constant 0 : index
    %49 = vector.load %arg9[%c0_28, %c0_29, %c0_30] : memref<4x8x256xf32, #tpu.memory_space<vmem>>, vector<1x8x256xf32>
    %50 = vector.shape_cast %49 : vector<1x8x256xf32> to vector<8x256xf32>
    %51 = arith.addf %50, %38 : vector<8x256xf32>
    %c0_31 = arith.constant 0 : index
    %c0_32 = arith.constant 0 : index
    %c0_33 = arith.constant 0 : index
    %52 = vector.load %arg9[%c0_31, %c0_32, %c0_33] : memref<4x8x256xf32, #tpu.memory_space<vmem>>, vector<1x8x256xf32>
    %53 = vector.shape_cast %52 : vector<1x8x256xf32> to vector<8x256xf32>
    %54 = vector.shape_cast %51 : vector<8x256xf32> to vector<1x8x256xf32>
    tpu.vector_store %arg9[%c0_31, %c0_32, %c0_33], %54 {strides = array<i32>} : memref<4x8x256xf32, #tpu.memory_space<vmem>>, vector<1x8x256xf32>,
    %c0_34 = arith.constant 0 : index
    %c0_35 = arith.constant 0 : index
    %c0_36 = arith.constant 0 : index
    %55 = vector.load %arg10[%c0_34, %c0_35, %c0_36] : memref<4x8x256xf32, #tpu.memory_space<vmem>>, vector<1x8x256xf32>
    %56 = vector.shape_cast %55 : vector<1x8x256xf32> to vector<8x256xf32>
    %cst_37 = arith.constant 1.000000e+00 : f32
    %cst_38 = arith.constant 0.000000e+00 : f32
    %57 = vector.broadcast %cst_37 : f32 to vector<8x256xf32>
    %58 = vector.broadcast %cst_38 : f32 to vector<8x256xf32>
    %59 = arith.select %40, %57, %58 : vector<8x256xi1>, vector<8x256xf32>
    %60 = arith.addf %56, %59 : vector<8x256xf32>
    %c0_39 = arith.constant 0 : index
    %c0_40 = arith.constant 0 : index
    %c0_41 = arith.constant 0 : index
    %61 = vector.load %arg10[%c0_39, %c0_40, %c0_41] : memref<4x8x256xf32, #tpu.memory_space<vmem>>, vector<1x8x256xf32>
    %62 = vector.shape_cast %61 : vector<1x8x256xf32> to vector<8x256xf32>
    %63 = vector.shape_cast %60 : vector<8x256xf32> to vector<1x8x256xf32>
    tpu.vector_store %arg10[%c0_39, %c0_40, %c0_41], %63 {strides = array<i32>} : memref<4x8x256xf32, #tpu.memory_space<vmem>>, vector<1x8x256xf32>,
    %64 = arith.mulf %21, %37 : vector<8x256xf32>
    %c1_i32 = arith.constant 1 : i32
    %65 = vector.broadcast %c1_i32 : i32 to vector<8x256xi32>
    %66 = arith.cmpi eq, %6, %65 : vector<8x256xi32>
    %c1_42 = arith.constant 1 : index
    %c0_43 = arith.constant 0 : index
    %c0_44 = arith.constant 0 : index
    %67 = vector.load %arg8[%c1_42, %c0_43, %c0_44] : memref<4x8x256xf32, #tpu.memory_space<vmem>>, vector<1x8x256xf32>
    %68 = vector.shape_cast %67 : vector<1x8x256xf32> to vector<8x256xf32>
    %cst_45 = arith.constant 0.000000e+00 : f32
    %69 = vector.broadcast %cst_45 : f32 to vector<8x256xf32>
    %70 = arith.select %66, %64, %69 : vector<8x256xi1>, vector<8x256xf32>
    %71 = arith.addf %68, %70 : vector<8x256xf32>
    %c1_46 = arith.constant 1 : index
    %c0_47 = arith.constant 0 : index
    %c0_48 = arith.constant 0 : index
    %72 = vector.load %arg8[%c1_46, %c0_47, %c0_48] : memref<4x8x256xf32, #tpu.memory_space<vmem>>, vector<1x8x256xf32>
    %73 = vector.shape_cast %72 : vector<1x8x256xf32> to vector<8x256xf32>
    %74 = vector.shape_cast %71 : vector<8x256xf32> to vector<1x8x256xf32>
    tpu.vector_store %arg8[%c1_46, %c0_47, %c0_48], %74 {strides = array<i32>} : memref<4x8x256xf32, #tpu.memory_space<vmem>>, vector<1x8x256xf32>,
    %c1_49 = arith.constant 1 : index
    %c0_50 = arith.constant 0 : index
    %c0_51 = arith.constant 0 : index
    %75 = vector.load %arg9[%c1_49, %c0_50, %c0_51] : memref<4x8x256xf32, #tpu.memory_space<vmem>>, vector<1x8x256xf32>
    %76 = vector.shape_cast %75 : vector<1x8x256xf32> to vector<8x256xf32>
    %77 = arith.addf %76, %64 : vector<8x256xf32>
    %c1_52 = arith.constant 1 : index
    %c0_53 = arith.constant 0 : index
    %c0_54 = arith.constant 0 : index
    %78 = vector.load %arg9[%c1_52, %c0_53, %c0_54] : memref<4x8x256xf32, #tpu.memory_space<vmem>>, vector<1x8x256xf32>
    %79 = vector.shape_cast %78 : vector<1x8x256xf32> to vector<8x256xf32>
    %80 = vector.shape_cast %77 : vector<8x256xf32> to vector<1x8x256xf32>
    tpu.vector_store %arg9[%c1_52, %c0_53, %c0_54], %80 {strides = array<i32>} : memref<4x8x256xf32, #tpu.memory_space<vmem>>, vector<1x8x256xf32>,
    %c1_55 = arith.constant 1 : index
    %c0_56 = arith.constant 0 : index
    %c0_57 = arith.constant 0 : index
    %81 = vector.load %arg10[%c1_55, %c0_56, %c0_57] : memref<4x8x256xf32, #tpu.memory_space<vmem>>, vector<1x8x256xf32>
    %82 = vector.shape_cast %81 : vector<1x8x256xf32> to vector<8x256xf32>
    %cst_58 = arith.constant 1.000000e+00 : f32
    %cst_59 = arith.constant 0.000000e+00 : f32
    %83 = vector.broadcast %cst_58 : f32 to vector<8x256xf32>
    %84 = vector.broadcast %cst_59 : f32 to vector<8x256xf32>
    %85 = arith.select %66, %83, %84 : vector<8x256xi1>, vector<8x256xf32>
    %86 = arith.addf %82, %85 : vector<8x256xf32>
    %c1_60 = arith.constant 1 : index
    %c0_61 = arith.constant 0 : index
    %c0_62 = arith.constant 0 : index
    %87 = vector.load %arg10[%c1_60, %c0_61, %c0_62] : memref<4x8x256xf32, #tpu.memory_space<vmem>>, vector<1x8x256xf32>
    %88 = vector.shape_cast %87 : vector<1x8x256xf32> to vector<8x256xf32>
    %89 = vector.shape_cast %86 : vector<8x256xf32> to vector<1x8x256xf32>
    tpu.vector_store %arg10[%c1_60, %c0_61, %c0_62], %89 {strides = array<i32>} : memref<4x8x256xf32, #tpu.memory_space<vmem>>, vector<1x8x256xf32>,
    %90 = arith.mulf %23, %37 : vector<8x256xf32>
    %c2_i32 = arith.constant 2 : i32
    %91 = vector.broadcast %c2_i32 : i32 to vector<8x256xi32>
    %92 = arith.cmpi eq, %6, %91 : vector<8x256xi32>
    %c2_63 = arith.constant 2 : index
    %c0_64 = arith.constant 0 : index
    %c0_65 = arith.constant 0 : index
    %93 = vector.load %arg8[%c2_63, %c0_64, %c0_65] : memref<4x8x256xf32, #tpu.memory_space<vmem>>, vector<1x8x256xf32>
    %94 = vector.shape_cast %93 : vector<1x8x256xf32> to vector<8x256xf32>
    %cst_66 = arith.constant 0.000000e+00 : f32
    %95 = vector.broadcast %cst_66 : f32 to vector<8x256xf32>
    %96 = arith.select %92, %90, %95 : vector<8x256xi1>, vector<8x256xf32>
    %97 = arith.addf %94, %96 : vector<8x256xf32>
    %c2_67 = arith.constant 2 : index
    %c0_68 = arith.constant 0 : index
    %c0_69 = arith.constant 0 : index
    %98 = vector.load %arg8[%c2_67, %c0_68, %c0_69] : memref<4x8x256xf32, #tpu.memory_space<vmem>>, vector<1x8x256xf32>
    %99 = vector.shape_cast %98 : vector<1x8x256xf32> to vector<8x256xf32>
    %100 = vector.shape_cast %97 : vector<8x256xf32> to vector<1x8x256xf32>
    tpu.vector_store %arg8[%c2_67, %c0_68, %c0_69], %100 {strides = array<i32>} : memref<4x8x256xf32, #tpu.memory_space<vmem>>, vector<1x8x256xf32>,
    %c2_70 = arith.constant 2 : index
    %c0_71 = arith.constant 0 : index
    %c0_72 = arith.constant 0 : index
    %101 = vector.load %arg9[%c2_70, %c0_71, %c0_72] : memref<4x8x256xf32, #tpu.memory_space<vmem>>, vector<1x8x256xf32>
    %102 = vector.shape_cast %101 : vector<1x8x256xf32> to vector<8x256xf32>
    %103 = arith.addf %102, %90 : vector<8x256xf32>
    %c2_73 = arith.constant 2 : index
    %c0_74 = arith.constant 0 : index
    %c0_75 = arith.constant 0 : index
    %104 = vector.load %arg9[%c2_73, %c0_74, %c0_75] : memref<4x8x256xf32, #tpu.memory_space<vmem>>, vector<1x8x256xf32>
    %105 = vector.shape_cast %104 : vector<1x8x256xf32> to vector<8x256xf32>
    %106 = vector.shape_cast %103 : vector<8x256xf32> to vector<1x8x256xf32>
    tpu.vector_store %arg9[%c2_73, %c0_74, %c0_75], %106 {strides = array<i32>} : memref<4x8x256xf32, #tpu.memory_space<vmem>>, vector<1x8x256xf32>,
    %c2_76 = arith.constant 2 : index
    %c0_77 = arith.constant 0 : index
    %c0_78 = arith.constant 0 : index
    %107 = vector.load %arg10[%c2_76, %c0_77, %c0_78] : memref<4x8x256xf32, #tpu.memory_space<vmem>>, vector<1x8x256xf32>
    %108 = vector.shape_cast %107 : vector<1x8x256xf32> to vector<8x256xf32>
    %cst_79 = arith.constant 1.000000e+00 : f32
    %cst_80 = arith.constant 0.000000e+00 : f32
    %109 = vector.broadcast %cst_79 : f32 to vector<8x256xf32>
    %110 = vector.broadcast %cst_80 : f32 to vector<8x256xf32>
    %111 = arith.select %92, %109, %110 : vector<8x256xi1>, vector<8x256xf32>
    %112 = arith.addf %108, %111 : vector<8x256xf32>
    %c2_81 = arith.constant 2 : index
    %c0_82 = arith.constant 0 : index
    %c0_83 = arith.constant 0 : index
    %113 = vector.load %arg10[%c2_81, %c0_82, %c0_83] : memref<4x8x256xf32, #tpu.memory_space<vmem>>, vector<1x8x256xf32>
    %114 = vector.shape_cast %113 : vector<1x8x256xf32> to vector<8x256xf32>
    %115 = vector.shape_cast %112 : vector<8x256xf32> to vector<1x8x256xf32>
    tpu.vector_store %arg10[%c2_81, %c0_82, %c0_83], %115 {strides = array<i32>} : memref<4x8x256xf32, #tpu.memory_space<vmem>>, vector<1x8x256xf32>,
    %116 = arith.mulf %25, %37 : vector<8x256xf32>
    %c3_i32 = arith.constant 3 : i32
    %117 = vector.broadcast %c3_i32 : i32 to vector<8x256xi32>
    %118 = arith.cmpi eq, %6, %117 : vector<8x256xi32>
    %c3_84 = arith.constant 3 : index
    %c0_85 = arith.constant 0 : index
    %c0_86 = arith.constant 0 : index
    %119 = vector.load %arg8[%c3_84, %c0_85, %c0_86] : memref<4x8x256xf32, #tpu.memory_space<vmem>>, vector<1x8x256xf32>
    %120 = vector.shape_cast %119 : vector<1x8x256xf32> to vector<8x256xf32>
    %cst_87 = arith.constant 0.000000e+00 : f32
    %121 = vector.broadcast %cst_87 : f32 to vector<8x256xf32>
    %122 = arith.select %118, %116, %121 : vector<8x256xi1>, vector<8x256xf32>
    %123 = arith.addf %120, %122 : vector<8x256xf32>
    %c3_88 = arith.constant 3 : index
    %c0_89 = arith.constant 0 : index
    %c0_90 = arith.constant 0 : index
    %124 = vector.load %arg8[%c3_88, %c0_89, %c0_90] : memref<4x8x256xf32, #tpu.memory_space<vmem>>, vector<1x8x256xf32>
    %125 = vector.shape_cast %124 : vector<1x8x256xf32> to vector<8x256xf32>
    %126 = vector.shape_cast %123 : vector<8x256xf32> to vector<1x8x256xf32>
    tpu.vector_store %arg8[%c3_88, %c0_89, %c0_90], %126 {strides = array<i32>} : memref<4x8x256xf32, #tpu.memory_space<vmem>>, vector<1x8x256xf32>,
    %c3_91 = arith.constant 3 : index
    %c0_92 = arith.constant 0 : index
    %c0_93 = arith.constant 0 : index
    %127 = vector.load %arg9[%c3_91, %c0_92, %c0_93] : memref<4x8x256xf32, #tpu.memory_space<vmem>>, vector<1x8x256xf32>
    %128 = vector.shape_cast %127 : vector<1x8x256xf32> to vector<8x256xf32>
    %129 = arith.addf %128, %116 : vector<8x256xf32>
    %c3_94 = arith.constant 3 : index
    %c0_95 = arith.constant 0 : index
    %c0_96 = arith.constant 0 : index
    %130 = vector.load %arg9[%c3_94, %c0_95, %c0_96] : memref<4x8x256xf32, #tpu.memory_space<vmem>>, vector<1x8x256xf32>
    %131 = vector.shape_cast %130 : vector<1x8x256xf32> to vector<8x256xf32>
    %132 = vector.shape_cast %129 : vector<8x256xf32> to vector<1x8x256xf32>
    tpu.vector_store %arg9[%c3_94, %c0_95, %c0_96], %132 {strides = array<i32>} : memref<4x8x256xf32, #tpu.memory_space<vmem>>, vector<1x8x256xf32>,
    %c3_97 = arith.constant 3 : index
    %c0_98 = arith.constant 0 : index
    %c0_99 = arith.constant 0 : index
    %133 = vector.load %arg10[%c3_97, %c0_98, %c0_99] : memref<4x8x256xf32, #tpu.memory_space<vmem>>, vector<1x8x256xf32>
    %134 = vector.shape_cast %133 : vector<1x8x256xf32> to vector<8x256xf32>
    %cst_100 = arith.constant 1.000000e+00 : f32
    %cst_101 = arith.constant 0.000000e+00 : f32
    %135 = vector.broadcast %cst_100 : f32 to vector<8x256xf32>
    %136 = vector.broadcast %cst_101 : f32 to vector<8x256xf32>
    %137 = arith.select %118, %135, %136 : vector<8x256xi1>, vector<8x256xf32>
    %138 = arith.addf %134, %137 : vector<8x256xf32>
    %c3_102 = arith.constant 3 : index
    %c0_103 = arith.constant 0 : index
    %c0_104 = arith.constant 0 : index
    %139 = vector.load %arg10[%c3_102, %c0_103, %c0_104] : memref<4x8x256xf32, #tpu.memory_space<vmem>>, vector<1x8x256xf32>
    %140 = vector.shape_cast %139 : vector<1x8x256xf32> to vector<8x256xf32>
    %141 = vector.shape_cast %138 : vector<8x256xf32> to vector<1x8x256xf32>
    tpu.vector_store %arg10[%c3_102, %c0_103, %c0_104], %141 {strides = array<i32>} : memref<4x8x256xf32, #tpu.memory_space<vmem>>, vector<1x8x256xf32>,
    %c1_i32_105 = arith.constant 1 : i32
    %142 = arith.cmpi eq, %arg1, %c1_i32_105 : i32
    %c0_i32_106 = arith.constant 0 : i32
    %143 = arith.cmpi eq, %arg2, %c0_i32_106 : i32
    %144 = arith.andi %142, %143 : i1
    %145 = arith.extui %144 : i1 to i32
    %c0_i32_107 = arith.constant 0 : i32
    %146 = arith.cmpi ne, %145, %c0_i32_107 : i32
    scf.if %146 {
      %c0_108 = arith.constant 0 : index
      %c0_109 = arith.constant 0 : index
      %c0_110 = arith.constant 0 : index
      %147 = vector.load %arg8[%c0_108, %c0_109, %c0_110] : memref<4x8x256xf32, #tpu.memory_space<vmem>>, vector<1x8x256xf32>
      %148 = vector.shape_cast %147 : vector<1x8x256xf32> to vector<8x256xf32>
      %cst_111 = arith.constant dense<0.000000e+00> : vector<256xf32>
      %149 = vector.multi_reduction <add>, %148, %cst_111 [0] : vector<8x256xf32> to vector<256xf32>
      %150 = vector.shape_cast %149 : vector<256xf32> to vector<1x256xf32>
      %c0_112 = arith.constant 0 : index
      %c0_113 = arith.constant 0 : index
      %c0_114 = arith.constant 0 : index
      %c0_115 = arith.constant 0 : index
      %151 = vector.load %arg5[%c0_112, %c0_113, %c0_114, %c0_115] : memref<1x4x1x256xf32, #tpu.memory_space<vmem>>, vector<1x1x1x256xf32>
      %152 = vector.shape_cast %151 : vector<1x1x1x256xf32> to vector<1x256xf32>
      %153 = vector.shape_cast %150 : vector<1x256xf32> to vector<1x1x1x256xf32>
      tpu.vector_store %arg5[%c0_112, %c0_113, %c0_114, %c0_115], %153 {strides = array<i32>} : memref<1x4x1x256xf32, #tpu.memory_space<vmem>>, vector<1x1x1x256xf32>,
      %c0_116 = arith.constant 0 : index
      %c0_117 = arith.constant 0 : index
      %c0_118 = arith.constant 0 : index
      %154 = vector.load %arg9[%c0_116, %c0_117, %c0_118] : memref<4x8x256xf32, #tpu.memory_space<vmem>>, vector<1x8x256xf32>
      %155 = vector.shape_cast %154 : vector<1x8x256xf32> to vector<8x256xf32>
      %cst_119 = arith.constant dense<0.000000e+00> : vector<256xf32>
      %156 = vector.multi_reduction <add>, %155, %cst_119 [0] : vector<8x256xf32> to vector<256xf32>
      %157 = vector.shape_cast %156 : vector<256xf32> to vector<1x256xf32>
      %c0_120 = arith.constant 0 : index
      %c0_121 = arith.constant 0 : index
      %c0_122 = arith.constant 0 : index
      %c0_123 = arith.constant 0 : index
      %158 = vector.load %arg6[%c0_120, %c0_121, %c0_122, %c0_123] : memref<1x4x1x256xf32, #tpu.memory_space<vmem>>, vector<1x1x1x256xf32>
      %159 = vector.shape_cast %158 : vector<1x1x1x256xf32> to vector<1x256xf32>
      %160 = vector.shape_cast %157 : vector<1x256xf32> to vector<1x1x1x256xf32>
      tpu.vector_store %arg6[%c0_120, %c0_121, %c0_122, %c0_123], %160 {strides = array<i32>} : memref<1x4x1x256xf32, #tpu.memory_space<vmem>>, vector<1x1x1x256xf32>,
      %c0_124 = arith.constant 0 : index
      %c0_125 = arith.constant 0 : index
      %c0_126 = arith.constant 0 : index
      %161 = vector.load %arg10[%c0_124, %c0_125, %c0_126] : memref<4x8x256xf32, #tpu.memory_space<vmem>>, vector<1x8x256xf32>
      %162 = vector.shape_cast %161 : vector<1x8x256xf32> to vector<8x256xf32>
      %cst_127 = arith.constant dense<0.000000e+00> : vector<256xf32>
      %163 = vector.multi_reduction <add>, %162, %cst_127 [0] : vector<8x256xf32> to vector<256xf32>
      %164 = vector.shape_cast %163 : vector<256xf32> to vector<1x256xf32>
      %c0_128 = arith.constant 0 : index
      %c0_129 = arith.constant 0 : index
      %c0_130 = arith.constant 0 : index
      %c0_131 = arith.constant 0 : index
      %165 = vector.load %arg7[%c0_128, %c0_129, %c0_130, %c0_131] : memref<1x4x1x256xf32, #tpu.memory_space<vmem>>, vector<1x1x1x256xf32>
      %166 = vector.shape_cast %165 : vector<1x1x1x256xf32> to vector<1x256xf32>
      %167 = vector.shape_cast %164 : vector<1x256xf32> to vector<1x1x1x256xf32>
      tpu.vector_store %arg7[%c0_128, %c0_129, %c0_130, %c0_131], %167 {strides = array<i32>} : memref<1x4x1x256xf32, #tpu.memory_space<vmem>>, vector<1x1x1x256xf32>,
      %c1_132 = arith.constant 1 : index
      %c0_133 = arith.constant 0 : index
      %c0_134 = arith.constant 0 : index
      %168 = vector.load %arg8[%c1_132, %c0_133, %c0_134] : memref<4x8x256xf32, #tpu.memory_space<vmem>>, vector<1x8x256xf32>
      %169 = vector.shape_cast %168 : vector<1x8x256xf32> to vector<8x256xf32>
      %cst_135 = arith.constant dense<0.000000e+00> : vector<256xf32>
      %170 = vector.multi_reduction <add>, %169, %cst_135 [0] : vector<8x256xf32> to vector<256xf32>
      %171 = vector.shape_cast %170 : vector<256xf32> to vector<1x256xf32>
      %c0_136 = arith.constant 0 : index
      %c1_137 = arith.constant 1 : index
      %c0_138 = arith.constant 0 : index
      %c0_139 = arith.constant 0 : index
      %172 = vector.load %arg5[%c0_136, %c1_137, %c0_138, %c0_139] : memref<1x4x1x256xf32, #tpu.memory_space<vmem>>, vector<1x1x1x256xf32>
      %173 = vector.shape_cast %172 : vector<1x1x1x256xf32> to vector<1x256xf32>
      %174 = vector.shape_cast %171 : vector<1x256xf32> to vector<1x1x1x256xf32>
      tpu.vector_store %arg5[%c0_136, %c1_137, %c0_138, %c0_139], %174 {strides = array<i32>} : memref<1x4x1x256xf32, #tpu.memory_space<vmem>>, vector<1x1x1x256xf32>,
      %c1_140 = arith.constant 1 : index
      %c0_141 = arith.constant 0 : index
      %c0_142 = arith.constant 0 : index
      %175 = vector.load %arg9[%c1_140, %c0_141, %c0_142] : memref<4x8x256xf32, #tpu.memory_space<vmem>>, vector<1x8x256xf32>
      %176 = vector.shape_cast %175 : vector<1x8x256xf32> to vector<8x256xf32>
      %cst_143 = arith.constant dense<0.000000e+00> : vector<256xf32>
      %177 = vector.multi_reduction <add>, %176, %cst_143 [0] : vector<8x256xf32> to vector<256xf32>
      %178 = vector.shape_cast %177 : vector<256xf32> to vector<1x256xf32>
      %c0_144 = arith.constant 0 : index
      %c1_145 = arith.constant 1 : index
      %c0_146 = arith.constant 0 : index
      %c0_147 = arith.constant 0 : index
      %179 = vector.load %arg6[%c0_144, %c1_145, %c0_146, %c0_147] : memref<1x4x1x256xf32, #tpu.memory_space<vmem>>, vector<1x1x1x256xf32>
      %180 = vector.shape_cast %179 : vector<1x1x1x256xf32> to vector<1x256xf32>
      %181 = vector.shape_cast %178 : vector<1x256xf32> to vector<1x1x1x256xf32>
      tpu.vector_store %arg6[%c0_144, %c1_145, %c0_146, %c0_147], %181 {strides = array<i32>} : memref<1x4x1x256xf32, #tpu.memory_space<vmem>>, vector<1x1x1x256xf32>,
      %c1_148 = arith.constant 1 : index
      %c0_149 = arith.constant 0 : index
      %c0_150 = arith.constant 0 : index
      %182 = vector.load %arg10[%c1_148, %c0_149, %c0_150] : memref<4x8x256xf32, #tpu.memory_space<vmem>>, vector<1x8x256xf32>
      %183 = vector.shape_cast %182 : vector<1x8x256xf32> to vector<8x256xf32>
      %cst_151 = arith.constant dense<0.000000e+00> : vector<256xf32>
      %184 = vector.multi_reduction <add>, %183, %cst_151 [0] : vector<8x256xf32> to vector<256xf32>
      %185 = vector.shape_cast %184 : vector<256xf32> to vector<1x256xf32>
      %c0_152 = arith.constant 0 : index
      %c1_153 = arith.constant 1 : index
      %c0_154 = arith.constant 0 : index
      %c0_155 = arith.constant 0 : index
      %186 = vector.load %arg7[%c0_152, %c1_153, %c0_154, %c0_155] : memref<1x4x1x256xf32, #tpu.memory_space<vmem>>, vector<1x1x1x256xf32>
      %187 = vector.shape_cast %186 : vector<1x1x1x256xf32> to vector<1x256xf32>
      %188 = vector.shape_cast %185 : vector<1x256xf32> to vector<1x1x1x256xf32>
      tpu.vector_store %arg7[%c0_152, %c1_153, %c0_154, %c0_155], %188 {strides = array<i32>} : memref<1x4x1x256xf32, #tpu.memory_space<vmem>>, vector<1x1x1x256xf32>,
      %c2_156 = arith.constant 2 : index
      %c0_157 = arith.constant 0 : index
      %c0_158 = arith.constant 0 : index
      %189 = vector.load %arg8[%c2_156, %c0_157, %c0_158] : memref<4x8x256xf32, #tpu.memory_space<vmem>>, vector<1x8x256xf32>
      %190 = vector.shape_cast %189 : vector<1x8x256xf32> to vector<8x256xf32>
      %cst_159 = arith.constant dense<0.000000e+00> : vector<256xf32>
      %191 = vector.multi_reduction <add>, %190, %cst_159 [0] : vector<8x256xf32> to vector<256xf32>
      %192 = vector.shape_cast %191 : vector<256xf32> to vector<1x256xf32>
      %c0_160 = arith.constant 0 : index
      %c2_161 = arith.constant 2 : index
      %c0_162 = arith.constant 0 : index
      %c0_163 = arith.constant 0 : index
      %193 = vector.load %arg5[%c0_160, %c2_161, %c0_162, %c0_163] : memref<1x4x1x256xf32, #tpu.memory_space<vmem>>, vector<1x1x1x256xf32>
      %194 = vector.shape_cast %193 : vector<1x1x1x256xf32> to vector<1x256xf32>
      %195 = vector.shape_cast %192 : vector<1x256xf32> to vector<1x1x1x256xf32>
      tpu.vector_store %arg5[%c0_160, %c2_161, %c0_162, %c0_163], %195 {strides = array<i32>} : memref<1x4x1x256xf32, #tpu.memory_space<vmem>>, vector<1x1x1x256xf32>,
      %c2_164 = arith.constant 2 : index
      %c0_165 = arith.constant 0 : index
      %c0_166 = arith.constant 0 : index
      %196 = vector.load %arg9[%c2_164, %c0_165, %c0_166] : memref<4x8x256xf32, #tpu.memory_space<vmem>>, vector<1x8x256xf32>
      %197 = vector.shape_cast %196 : vector<1x8x256xf32> to vector<8x256xf32>
      %cst_167 = arith.constant dense<0.000000e+00> : vector<256xf32>
      %198 = vector.multi_reduction <add>, %197, %cst_167 [0] : vector<8x256xf32> to vector<256xf32>
      %199 = vector.shape_cast %198 : vector<256xf32> to vector<1x256xf32>
      %c0_168 = arith.constant 0 : index
      %c2_169 = arith.constant 2 : index
      %c0_170 = arith.constant 0 : index
      %c0_171 = arith.constant 0 : index
      %200 = vector.load %arg6[%c0_168, %c2_169, %c0_170, %c0_171] : memref<1x4x1x256xf32, #tpu.memory_space<vmem>>, vector<1x1x1x256xf32>
      %201 = vector.shape_cast %200 : vector<1x1x1x256xf32> to vector<1x256xf32>
      %202 = vector.shape_cast %199 : vector<1x256xf32> to vector<1x1x1x256xf32>
      tpu.vector_store %arg6[%c0_168, %c2_169, %c0_170, %c0_171], %202 {strides = array<i32>} : memref<1x4x1x256xf32, #tpu.memory_space<vmem>>, vector<1x1x1x256xf32>,
      %c2_172 = arith.constant 2 : index
      %c0_173 = arith.constant 0 : index
      %c0_174 = arith.constant 0 : index
      %203 = vector.load %arg10[%c2_172, %c0_173, %c0_174] : memref<4x8x256xf32, #tpu.memory_space<vmem>>, vector<1x8x256xf32>
      %204 = vector.shape_cast %203 : vector<1x8x256xf32> to vector<8x256xf32>
      %cst_175 = arith.constant dense<0.000000e+00> : vector<256xf32>
      %205 = vector.multi_reduction <add>, %204, %cst_175 [0] : vector<8x256xf32> to vector<256xf32>
      %206 = vector.shape_cast %205 : vector<256xf32> to vector<1x256xf32>
      %c0_176 = arith.constant 0 : index
      %c2_177 = arith.constant 2 : index
      %c0_178 = arith.constant 0 : index
      %c0_179 = arith.constant 0 : index
      %207 = vector.load %arg7[%c0_176, %c2_177, %c0_178, %c0_179] : memref<1x4x1x256xf32, #tpu.memory_space<vmem>>, vector<1x1x1x256xf32>
      %208 = vector.shape_cast %207 : vector<1x1x1x256xf32> to vector<1x256xf32>
      %209 = vector.shape_cast %206 : vector<1x256xf32> to vector<1x1x1x256xf32>
      tpu.vector_store %arg7[%c0_176, %c2_177, %c0_178, %c0_179], %209 {strides = array<i32>} : memref<1x4x1x256xf32, #tpu.memory_space<vmem>>, vector<1x1x1x256xf32>,
      %c3_180 = arith.constant 3 : index
      %c0_181 = arith.constant 0 : index
      %c0_182 = arith.constant 0 : index
      %210 = vector.load %arg8[%c3_180, %c0_181, %c0_182] : memref<4x8x256xf32, #tpu.memory_space<vmem>>, vector<1x8x256xf32>
      %211 = vector.shape_cast %210 : vector<1x8x256xf32> to vector<8x256xf32>
      %cst_183 = arith.constant dense<0.000000e+00> : vector<256xf32>
      %212 = vector.multi_reduction <add>, %211, %cst_183 [0] : vector<8x256xf32> to vector<256xf32>
      %213 = vector.shape_cast %212 : vector<256xf32> to vector<1x256xf32>
      %c0_184 = arith.constant 0 : index
      %c3_185 = arith.constant 3 : index
      %c0_186 = arith.constant 0 : index
      %c0_187 = arith.constant 0 : index
      %214 = vector.load %arg5[%c0_184, %c3_185, %c0_186, %c0_187] : memref<1x4x1x256xf32, #tpu.memory_space<vmem>>, vector<1x1x1x256xf32>
      %215 = vector.shape_cast %214 : vector<1x1x1x256xf32> to vector<1x256xf32>
      %216 = vector.shape_cast %213 : vector<1x256xf32> to vector<1x1x1x256xf32>
      tpu.vector_store %arg5[%c0_184, %c3_185, %c0_186, %c0_187], %216 {strides = array<i32>} : memref<1x4x1x256xf32, #tpu.memory_space<vmem>>, vector<1x1x1x256xf32>,
      %c3_188 = arith.constant 3 : index
      %c0_189 = arith.constant 0 : index
      %c0_190 = arith.constant 0 : index
      %217 = vector.load %arg9[%c3_188, %c0_189, %c0_190] : memref<4x8x256xf32, #tpu.memory_space<vmem>>, vector<1x8x256xf32>
      %218 = vector.shape_cast %217 : vector<1x8x256xf32> to vector<8x256xf32>
      %cst_191 = arith.constant dense<0.000000e+00> : vector<256xf32>
      %219 = vector.multi_reduction <add>, %218, %cst_191 [0] : vector<8x256xf32> to vector<256xf32>
      %220 = vector.shape_cast %219 : vector<256xf32> to vector<1x256xf32>
      %c0_192 = arith.constant 0 : index
      %c3_193 = arith.constant 3 : index
      %c0_194 = arith.constant 0 : index
      %c0_195 = arith.constant 0 : index
      %221 = vector.load %arg6[%c0_192, %c3_193, %c0_194, %c0_195] : memref<1x4x1x256xf32, #tpu.memory_space<vmem>>, vector<1x1x1x256xf32>
      %222 = vector.shape_cast %221 : vector<1x1x1x256xf32> to vector<1x256xf32>
      %223 = vector.shape_cast %220 : vector<1x256xf32> to vector<1x1x1x256xf32>
      tpu.vector_store %arg6[%c0_192, %c3_193, %c0_194, %c0_195], %223 {strides = array<i32>} : memref<1x4x1x256xf32, #tpu.memory_space<vmem>>, vector<1x1x1x256xf32>,
      %c3_196 = arith.constant 3 : index
      %c0_197 = arith.constant 0 : index
      %c0_198 = arith.constant 0 : index
      %224 = vector.load %arg10[%c3_196, %c0_197, %c0_198] : memref<4x8x256xf32, #tpu.memory_space<vmem>>, vector<1x8x256xf32>
      %225 = vector.shape_cast %224 : vector<1x8x256xf32> to vector<8x256xf32>
      %cst_199 = arith.constant dense<0.000000e+00> : vector<256xf32>
      %226 = vector.multi_reduction <add>, %225, %cst_199 [0] : vector<8x256xf32> to vector<256xf32>
      %227 = vector.shape_cast %226 : vector<256xf32> to vector<1x256xf32>
      %c0_200 = arith.constant 0 : index
      %c3_201 = arith.constant 3 : index
      %c0_202 = arith.constant 0 : index
      %c0_203 = arith.constant 0 : index
      %228 = vector.load %arg7[%c0_200, %c3_201, %c0_202, %c0_203] : memref<1x4x1x256xf32, #tpu.memory_space<vmem>>, vector<1x1x1x256xf32>
      %229 = vector.shape_cast %228 : vector<1x1x1x256xf32> to vector<1x256xf32>
      %230 = vector.shape_cast %227 : vector<1x256xf32> to vector<1x1x1x256xf32>
      tpu.vector_store %arg7[%c0_200, %c3_201, %c0_202, %c0_203], %230 {strides = array<i32>} : memref<1x4x1x256xf32, #tpu.memory_space<vmem>>, vector<1x1x1x256xf32>,
    } else {
    }
    return
  }
  func.func @transform_0(%arg0: i32, %arg1: i32, %arg2: i32) -> (i32, i32, i32, i32) {
    %c1_i32 = arith.constant 1 : i32
    %0 = arith.muli %arg0, %c1_i32 : i32
    %1 = arith.addi %0, %arg2 : i32
    %c0_i32 = arith.constant 0 : i32
    %c0_i32_0 = arith.constant 0 : i32
    %c0_i32_1 = arith.constant 0 : i32
    return %arg1, %c0_i32, %1, %c0_i32_0 : i32, i32, i32, i32
  }
  func.func @transform_1(%arg0: i32, %arg1: i32, %arg2: i32) -> (i32, i32, i32, i32) {
    %c1_i32 = arith.constant 1 : i32
    %0 = arith.muli %arg0, %c1_i32 : i32
    %1 = arith.addi %0, %arg2 : i32
    %c0_i32 = arith.constant 0 : i32
    %c0_i32_0 = arith.constant 0 : i32
    %c0_i32_1 = arith.constant 0 : i32
    return %arg1, %c0_i32, %1, %c0_i32_0 : i32, i32, i32, i32
  }
  func.func @transform_2(%arg0: i32, %arg1: i32, %arg2: i32) -> (i32, i32, i32, i32) {
    %c0_i32 = arith.constant 0 : i32
    %c0_i32_0 = arith.constant 0 : i32
    %c0_i32_1 = arith.constant 0 : i32
    %c0_i32_2 = arith.constant 0 : i32
    return %arg0, %c0_i32, %c0_i32_0, %c0_i32_1 : i32, i32, i32, i32
  }
  func.func @transform_3(%arg0: i32, %arg1: i32, %arg2: i32) -> (i32, i32, i32, i32) {
    %c0_i32 = arith.constant 0 : i32
    %c0_i32_0 = arith.constant 0 : i32
    %c0_i32_1 = arith.constant 0 : i32
    %c0_i32_2 = arith.constant 0 : i32
    return %arg0, %c0_i32, %c0_i32_0, %c0_i32_1 : i32, i32, i32, i32
  }
  func.func @transform_4(%arg0: i32, %arg1: i32, %arg2: i32) -> (i32, i32, i32, i32) {
    %c0_i32 = arith.constant 0 : i32
    %c0_i32_0 = arith.constant 0 : i32
    %c0_i32_1 = arith.constant 0 : i32
    %c0_i32_2 = arith.constant 0 : i32
    return %arg0, %c0_i32, %c0_i32_0, %c0_i32_1 : i32, i32, i32, i32
  }
}

</mosaic_0001>

<llo_original>
// kernel: tpu_custom_call.1
$region0: #{tpu_custom_call.1}
  #allocation0 [shape = 'u32[]', space=smem, size = 0x4, offset = 0x4, fixed_abs, tag = 'smem constant byte address 0x4 - core index']
  #allocation1 [shape = 'u32[144,128]{1,0:T(1,128)}', space=vmem, size = 0x12000, scoped, tag = 'internal scratch']
  #allocation2 [shape = 'f32[4,8,256]{2,1,0:T(8,128)}', space=vmem, size = 0x8000, scoped, tag = 'scratch operand']
  #allocation3 [shape = 'f32[4,8,256]{2,1,0:T(8,128)}', space=vmem, size = 0x8000, scoped, tag = 'scratch operand']
  #allocation4 [shape = 'f32[4,8,256]{2,1,0:T(8,128)}', space=vmem, size = 0x8000, scoped, tag = 'scratch operand']
  %s0 = inlined_call_operand.hbm [shape: f32[2,4,8,256], index: 0, kind: input, shape index: {}]
  %s1 = inlined_call_operand.hbm [shape: s32[2,1,8,256], index: 1, kind: input, shape index: {}]
  %s2 = inlined_call_operand.hbm [shape: f32[1,4,1,256], index: 2, kind: output, shape index: {0}]
  %s3 = inlined_call_operand.hbm [shape: f32[1,4,1,256], index: 3, kind: output, shape index: {1}]
  %s4 = inlined_call_operand.hbm [shape: f32[1,4,1,256], index: 4, kind: output, shape index: {2}]
  %5 = xla_tuple %s2, %s3, %s4
  %s6 = sld [smem:[#allocation0]]
  $region73: #{tpu_custom_call.1} parent=0
    _
  %s8 = ssub.s32 1, %s6
  %s9 = scalar_select 0, %s8, %s6
  $region1: #{tpu_custom_call.1} parent=0
    #allocation5 [shape = 'u8[65536]{0}', space=vmem, size = 0x10000, scoped, tag = 'input window, operand 0']
    #allocation6 [shape = 's32[2]{0}', space=sflag, size = 0x8, scoped, tag = 'scoped memory for tpu_custom_call.1']
    #allocation7 [shape = 's32[2]{0}', space=sflag, size = 0x8, scoped, tag = 'scoped memory for tpu_custom_call.1']
    #allocation8 [shape = 'u8[16384]{0}', space=vmem, size = 0x4000, scoped, tag = 'input window, operand 1']
    #allocation9 [shape = 's32[2]{0}', space=sflag, size = 0x8, scoped, tag = 'scoped memory for tpu_custom_call.1']
    #allocation10 [shape = 'u8[4096]{0}', space=vmem, size = 0x1000, scoped, tag = 'output window, operand 0, single buffered']
    #allocation11 [shape = 'u8[4096]{0}', space=vmem, size = 0x1000, scoped, tag = 'output window, operand 1, single buffered']
    #allocation12 [shape = 's32[1]{0}', space=sflag, size = 0x4, scoped, tag = 'scoped memory for tpu_custom_call.1']
    #allocation13 [shape = 'u8[4096]{0}', space=vmem, size = 0x1000, scoped, tag = 'output window, operand 2, single buffered']
    %10 = vsyncpa [#allocation6], 0
    %s11 = scalar_lea.sflag [#allocation6], 1
    %12 = vsyncpa %s11, 0
    %13 = vsyncpa [#allocation9], 0
    %s14 = scalar_lea.sflag [#allocation9], 1
    %15 = vsyncpa %s14, 0
    %16 = vsyncpa [#allocation7], 0
    %17 = vsyncpa [#allocation12], 0
    loop: start=0, step=1, limit=4
    $region2: #{tpu_custom_call.1} parent=1 // loop_pre_header
      _
    $region3: #{tpu_custom_call.1} parent=1 // loop_header
      %s19 = sphi 0, %s23
      %p20 = scmp.ge.s32.totalorder %s19, 4
      %s26 = sphi 0, %s45
      %s27 = sphi 0, %s41
      %s28 = sphi 0, %s37
      %s29 = sphi 0, %s26
      %s30 = sphi 0, %s27
      %s31 = sphi 0, %s28
      %s32 = sphi 0, %s29
      %s33 = sphi 0, %s30
      %s34 = sphi 0, %s31
      %s52 = sphi 0, %s54
      %s55 = sphi 0, %s52
      %s56 = sphi 0, %s55
      %s72 = sphi 0, %s56
      %s82 = sphi 0, %s84
      %s85 = sphi 0, %s82
      %s86 = sphi 0, %s85
      %s102 = sphi 0, %s86
      %s108 = sphi 0, %s110
      %s111 = sphi 0, %s108
      %s112 = sphi 0, %s111
      %s128 = sphi 0, %s112
      %s134 = sphi 0, %s136
      %s137 = sphi 0, %s134
      %s138 = sphi 0, %s137
      %s154 = sphi 0, %s138
      %s160 = sphi 0, %s162
      %s163 = sphi 0, %s160
      %s164 = sphi 0, %s163
      %s180 = sphi 0, %s164
    $region4: #{tpu_custom_call.1} parent=1 // loop_header_branch
      %22 = sbr.rel (%p20) target = $region8
    $region5: #{tpu_custom_call.1} parent=1 // loop_body
      %s24 = ssub.s32 %s19, 1
      %s25 = ssub.s32 %s19, 2
      %s35 = sadd.s32 1, %s28
      %p36 = scmp.ge.s32.totalorder %s35, 1
      %s37 = scalar_select %p36, 0, %s35
      %s38 = sadd.s32 1, %s27
      %s39 = scalar_select %p36, %s38, %s27
      %p40 = scmp.ge.s32.totalorder %s39, 2
      %s41 = scalar_select %p40, 0, %s39
      %s42 = sadd.s32 1, %s26
      %s43 = scalar_select %p40, %s42, %s26
      %p44 = scmp.ge.s32.totalorder %s43, 1
      %s45 = scalar_select %p44, 0, %s43
      %s46 = sadd.s32 %s26, %s28
      %s47 = sadd.s32 %s45, %s37
      %s48 = ssub.s32 %s27, %s41
      %s49 = ssub.s32 %s46, %s47
      %s50 = sor.u32 %s48, %s49
      %p51 = scmp.eq.s32.totalorder %s50, 0
      %s53 = sadd.s32 %s52, 1
      %s54 = scalar_select %p51, %s52, %s53
      %p57 = pneg %p51
      %p58 = scmp.eq.s32.totalorder %s19, 1
      %p59 = por %p57, %p58
      %p60 = scmp.ne.s32.totalorder %s52, %s55
      %p61 = scmp.eq.s32.totalorder %s19, 0
      %p62 = por %p60, %p61
      %p63 = scmp.ne.s32.totalorder %s52, %s55
      %p64 = scmp.eq.s32.totalorder %s24, 1
      %p65 = por %p63, %p64
      %p66 = scmp.ne.s32.totalorder %s55, %s56
      %p67 = scmp.eq.s32.totalorder %s24, 0
      %p68 = por %p66, %p67
      %p69 = scmp.ne.s32.totalorder %s55, %s56
      %p70 = scmp.eq.s32.totalorder %s25, 1
      %p71 = por %p69, %p70
      %p73 = scmp.ne.s32.totalorder %s56, %s72
      %p74 = scmp.eq.s32.totalorder %s25, 0
      %p75 = por %p73, %p74
      %s76 = sadd.s32 %s26, %s28
      %s77 = sadd.s32 %s45, %s37
      %s78 = ssub.s32 %s27, %s41
      %s79 = ssub.s32 %s76, %s77
      %s80 = sor.u32 %s78, %s79
      %p81 = scmp.eq.s32.totalorder %s80, 0
      %s83 = sadd.s32 %s82, 1
      %s84 = scalar_select %p81, %s82, %s83
      %p87 = pneg %p81
      %p88 = scmp.eq.s32.totalorder %s19, 1
      %p89 = por %p87, %p88
      %p90 = scmp.ne.s32.totalorder %s82, %s85
      %p91 = scmp.eq.s32.totalorder %s19, 0
      %p92 = por %p90, %p91
      %p93 = scmp.ne.s32.totalorder %s82, %s85
      %p94 = scmp.eq.s32.totalorder %s24, 1
      %p95 = por %p93, %p94
      %p96 = scmp.ne.s32.totalorder %s85, %s86
      %p97 = scmp.eq.s32.totalorder %s24, 0
      %p98 = por %p96, %p97
      %p99 = scmp.ne.s32.totalorder %s85, %s86
      %p100 = scmp.eq.s32.totalorder %s25, 1
      %p101 = por %p99, %p100
      %p103 = scmp.ne.s32.totalorder %s86, %s102
      %p104 = scmp.eq.s32.totalorder %s25, 0
      %p105 = por %p103, %p104
      %s106 = ssub.s32 %s26, %s45
      %p107 = scmp.eq.s32.totalorder %s106, 0
      %s109 = sadd.s32 %s108, 1
      %s110 = scalar_select %p107, %s108, %s109
      %p113 = pneg %p107
      %p114 = scmp.eq.s32.totalorder %s19, 1
      %p115 = por %p113, %p114
      %p116 = scmp.ne.s32.totalorder %s108, %s111
      %p117 = scmp.eq.s32.totalorder %s19, 0
      %p118 = por %p116, %p117
      %p119 = scmp.ne.s32.totalorder %s108, %s111
      %p120 = scmp.eq.s32.totalorder %s24, 1
      %p121 = por %p119, %p120
      %p122 = scmp.ne.s32.totalorder %s111, %s112
      %p123 = scmp.eq.s32.totalorder %s24, 0
      %p124 = por %p122, %p123
      %p125 = scmp.ne.s32.totalorder %s111, %s112
      %p126 = scmp.eq.s32.totalorder %s25, 1
      %p127 = por %p125, %p126
      %p129 = scmp.ne.s32.totalorder %s112, %s128
      %p130 = scmp.eq.s32.totalorder %s25, 0
      %p131 = por %p129, %p130
      %s132 = ssub.s32 %s26, %s45
      %p133 = scmp.eq.s32.totalorder %s132, 0
      %s135 = sadd.s32 %s134, 1
      %s136 = scalar_select %p133, %s134, %s135
      %p139 = pneg %p133
      %p140 = scmp.eq.s32.totalorder %s19, 1
      %p141 = por %p139, %p140
      %p142 = scmp.ne.s32.totalorder %s134, %s137
      %p143 = scmp.eq.s32.totalorder %s19, 0
      %p144 = por %p142, %p143
      %p145 = scmp.ne.s32.totalorder %s134, %s137
      %p146 = scmp.eq.s32.totalorder %s24, 1
      %p147 = por %p145, %p146
      %p148 = scmp.ne.s32.totalorder %s137, %s138
      %p149 = scmp.eq.s32.totalorder %s24, 0
      %p150 = por %p148, %p149
      %p151 = scmp.ne.s32.totalorder %s137, %s138
      %p152 = scmp.eq.s32.totalorder %s25, 1
      %p153 = por %p151, %p152
      %p155 = scmp.ne.s32.totalorder %s138, %s154
      %p156 = scmp.eq.s32.totalorder %s25, 0
      %p157 = por %p155, %p156
      %s158 = ssub.s32 %s26, %s45
      %p159 = scmp.eq.s32.totalorder %s158, 0
      %s161 = sadd.s32 %s160, 1
      %s162 = scalar_select %p159, %s160, %s161
      %p165 = pneg %p159
      %p166 = scmp.eq.s32.totalorder %s19, 1
      %p167 = por %p165, %p166
      %p168 = scmp.ne.s32.totalorder %s160, %s163
      %p169 = scmp.eq.s32.totalorder %s19, 0
      %p170 = por %p168, %p169
      %p171 = scmp.ne.s32.totalorder %s160, %s163
      %p172 = scmp.eq.s32.totalorder %s24, 1
      %p173 = por %p171, %p172
      %p174 = scmp.ne.s32.totalorder %s163, %s164
      %p175 = scmp.eq.s32.totalorder %s24, 0
      %p176 = por %p174, %p175
      %p177 = scmp.ne.s32.totalorder %s163, %s164
      %p178 = scmp.eq.s32.totalorder %s25, 1
      %p179 = por %p177, %p178
      %p181 = scmp.ne.s32.totalorder %s164, %s180
      %p182 = scmp.eq.s32.totalorder %s25, 0
      %p183 = por %p181, %p182
      %p184 = scmp.le.s32.totalorder 1, %s19
      %p185 = scmp.lt.s32.totalorder %s19, 3
      %p186 = pnand %p184, %p185
      %p187 = pneg %p186
      // Predicated region
      $region9: #{tpu_custom_call.1} parent=5 // pred_check
        _
      $region10: #{tpu_custom_call.1} parent=5 // pred_check_branch
        %189 = sbr.rel (%p186) target = $region12
      $region11: #{tpu_custom_call.1} parent=5 // pred_region
        %s190 = ssub.s32 %s19, 1
      $region12: #{tpu_custom_call.1} parent=5 // pred_fallthru
        _
      %p191 = scmp.lt.s32.totalorder %s19, 2
      // Predicated region
      $region13: #{tpu_custom_call.1} parent=5 // pred_check
        %p192 = pneg %p191
      $region14: #{tpu_custom_call.1} parent=5 // pred_check_branch
        %194 = sbr.rel (%p192) target = $region16
      $region15: #{tpu_custom_call.1} parent=5 // pred_region
        // Predicated region
        $region17: #{tpu_custom_call.1} parent=15 // pred_check
          %p195 = pneg %p62
        $region18: #{tpu_custom_call.1} parent=15 // pred_check_branch
          %197 = sbr.rel (%p195) target = $region20
        $region19: #{tpu_custom_call.1} parent=15 // pred_region
          %s198 = sand.u32 %s52, 1
          %s199 = scalar_lea.sflag [#allocation6], %s198
          %s200 = sand.u32 %s52, 1
          %s201 = smul.addr %s200, 64
          %s202 = scalar_lea.vmem [#allocation5], %s201
          %s203 = sadd.s32 %s26, %s28
          %s205 = ssub.s32 1024, 1024
          %206 = vsyncadd %s199, %s205
          %s207 = smul.addr %s203, 2
          %s208 = smul.addr %s27, 8
          %s209 = sadd.s32 %s207, %s208
          %s210 = smul.addr %s209, 128
          %s211 = scalar_lea.hbm %s0, %s210
          %s212 = sshll.u32 %s202, 4
          %s213 = int_to_ptr.vmem [resolvable:$true] %s212
          %218 = dma.hbm_to_vmem [thread:$0]  %s211, 1024, %s213, %s199, 256, 256, 16
        $region20: #{tpu_custom_call.1} parent=15 // pred_fallthru
          _
        // Predicated region
        $region21: #{tpu_custom_call.1} parent=15 // pred_check
          %p219 = pneg %p92
        $region22: #{tpu_custom_call.1} parent=15 // pred_check_branch
          %221 = sbr.rel (%p219) target = $region24
        $region23: #{tpu_custom_call.1} parent=15 // pred_region
          %s222 = sand.u32 %s82, 1
          %s223 = scalar_lea.sflag [#allocation9], %s222
          %s224 = sand.u32 %s82, 1
          %s225 = smul.addr %s224, 16
          %s226 = scalar_lea.vmem [#allocation8], %s225
          %s227 = sadd.s32 %s26, %s28
          %s229 = ssub.s32 256, 256
          %230 = vsyncadd %s223, %s229
          %s231 = smul.addr %s227, 2
          %s232 = smul.addr %s27, 2
          %s233 = sadd.s32 %s231, %s232
          %s234 = smul.addr %s233, 128
          %s235 = scalar_lea.hbm %s1, %s234
          %s237 = sshll.u32 %s226, 4
          %s238 = int_to_ptr.vmem [resolvable:$true] %s237
          %240 = dma.hbm_to_vmem [thread:$0]  %s235, 256, %s238, %s223
        $region24: #{tpu_custom_call.1} parent=15 // pred_fallthru
          _
      $region16: #{tpu_custom_call.1} parent=5 // pred_fallthru
        _
      %p241 = scmp.le.s32.totalorder 1, %s19
      %p242 = scmp.lt.s32.totalorder %s19, 3
      %p243 = pnand %p241, %p242
      %p244 = pneg %p243
      // Predicated region
      $region25: #{tpu_custom_call.1} parent=5 // pred_check
        _
      $region26: #{tpu_custom_call.1} parent=5 // pred_check_branch
        %246 = sbr.rel (%p243) target = $region28
      $region27: #{tpu_custom_call.1} parent=5 // pred_region
        %s247 = ssub.s32 %s19, 1
        %s248 = sand.u32 %s55, 1
        %s249 = scalar_lea.sflag [#allocation6], %s248
        %s250 = sand.u32 %s55, 1
        %s251 = smul.addr %s250, 64
        %s252 = scalar_lea.vmem [#allocation5], %s251
        // Predicated region
        $region29: #{tpu_custom_call.1} parent=27 // pred_check
          %p253 = pneg %p68
        $region30: #{tpu_custom_call.1} parent=27 // pred_check_branch
          %255 = sbr.rel (%p253) target = $region32
        $region31: #{tpu_custom_call.1} parent=27 // pred_region
          %256 = dma.done %s249, 1024
        $region32: #{tpu_custom_call.1} parent=27 // pred_fallthru
          _
        %s257 = sand.u32 %s85, 1
        %s258 = scalar_lea.sflag [#allocation9], %s257
        %s259 = sand.u32 %s85, 1
        %s260 = smul.addr %s259, 16
        %s261 = scalar_lea.vmem [#allocation8], %s260
        // Predicated region
        $region33: #{tpu_custom_call.1} parent=27 // pred_check
          %p262 = pneg %p98
        $region34: #{tpu_custom_call.1} parent=27 // pred_check_branch
          %264 = sbr.rel (%p262) target = $region36
        $region35: #{tpu_custom_call.1} parent=27 // pred_region
          %265 = dma.done %s258, 256
        $region36: #{tpu_custom_call.1} parent=27 // pred_fallthru
          _
        %s266 = sand.u32 %s55, 1
        %s267 = scalar_lea.sflag [#allocation6], %s266
        %s268 = sand.u32 %s55, 1
        %s269 = smul.addr %s268, 64
        %s270 = scalar_lea.vmem [#allocation5], %s269
        %p271 = pneg %p68
        %p272 = pneg %p65
        %s273 = sand.u32 %s85, 1
        %s274 = scalar_lea.sflag [#allocation9], %s273
        %s275 = sand.u32 %s85, 1
        %s276 = smul.addr %s275, 16
        %s277 = scalar_lea.vmem [#allocation8], %s276
        %p278 = pneg %p98
        %p279 = pneg %p95
        %p280 = pneg %p124
        %p281 = pneg %p121
        %p282 = pneg %p150
        %p283 = pneg %p147
        %p284 = pneg %p176
        %p285 = pneg %p173
        %s286 = sadd.s32 %s29, %s31
        %s287 = sadd.s32 %s29, %s31
        %p288 = scmp.eq.s32.totalorder %s30, 0
        %p289 = scmp.eq.s32.totalorder %s31, 0
        %p290 = pnand %p288, %p289
        %p291 = pneg %p290
        // Predicated region
        $region37: #{tpu_custom_call.1} parent=27 // pred_check
          _
        $region38: #{tpu_custom_call.1} parent=27 // pred_check_branch
          %293 = sbr.rel (%p290) target = $region40
        $region39: #{tpu_custom_call.1} parent=27 // pred_region
          %294 = vst [vmem:[#allocation2] sm:$0xff] 0.0
          %295 = vst [vmem:[#allocation2 + $0x8] sm:$0xff] 0.0
          %296 = vst [vmem:[#allocation2 + $0x10] sm:$0xff] 0.0
          %297 = vst [vmem:[#allocation2 + $0x18] sm:$0xff] 0.0
          %298 = vst [vmem:[#allocation2 + $0x20] sm:$0xff] 0.0
          %299 = vst [vmem:[#allocation2 + $0x28] sm:$0xff] 0.0
          %300 = vst [vmem:[#allocation2 + $0x30] sm:$0xff] 0.0
          %301 = vst [vmem:[#allocation2 + $0x38] sm:$0xff] 0.0
          %302 = vst [vmem:[#allocation3] sm:$0xff] 0.0
          %303 = vst [vmem:[#allocation3 + $0x8] sm:$0xff] 0.0
          %304 = vst [vmem:[#allocation3 + $0x10] sm:$0xff] 0.0
          %305 = vst [vmem:[#allocation3 + $0x18] sm:$0xff] 0.0
          %306 = vst [vmem:[#allocation3 + $0x20] sm:$0xff] 0.0
          %307 = vst [vmem:[#allocation3 + $0x28] sm:$0xff] 0.0
          %308 = vst [vmem:[#allocation3 + $0x30] sm:$0xff] 0.0
          %309 = vst [vmem:[#allocation3 + $0x38] sm:$0xff] 0.0
          %310 = vst [vmem:[#allocation4] sm:$0xff] 0.0
          %311 = vst [vmem:[#allocation4 + $0x8] sm:$0xff] 0.0
          %312 = vst [vmem:[#allocation4 + $0x10] sm:$0xff] 0.0
          %313 = vst [vmem:[#allocation4 + $0x18] sm:$0xff] 0.0
          %314 = vst [vmem:[#allocation4 + $0x20] sm:$0xff] 0.0
          %315 = vst [vmem:[#allocation4 + $0x28] sm:$0xff] 0.0
          %316 = vst [vmem:[#allocation4 + $0x30] sm:$0xff] 0.0
          %317 = vst [vmem:[#allocation4 + $0x38] sm:$0xff] 0.0
        $region40: #{tpu_custom_call.1} parent=27 // pred_fallthru
          _
        %v318 = vld [vmem:[%s261] sm:$0xff]
        %v319 = vld [vmem:[%s261 + $0x8] sm:$0xff]
        %v320 = vld [vmem:[%s252] sm:$0xff]
        %v321 = vld [vmem:[%s252 + $0x8] sm:$0xff]
        %s322 = scalar_lea.vmem %s252, 16 [#allocation5]
        %v323 = vld [vmem:[%s322] sm:$0xff]
        %v324 = vld [vmem:[%s322 + $0x8] sm:$0xff]
        %s325 = scalar_lea.vmem %s252, 32 [#allocation5]
        %v326 = vld [vmem:[%s325] sm:$0xff]
        %v327 = vld [vmem:[%s325 + $0x8] sm:$0xff]
        %s328 = scalar_lea.vmem %s252, 48 [#allocation5]
        %v329 = vld [vmem:[%s328] sm:$0xff]
        %v330 = vld [vmem:[%s328 + $0x8] sm:$0xff]
        %v331 = vmax.f32 %v320, %v323
        %v332 = vmax.f32 %v321, %v324
        %v333 = vmax.f32 %v331, %v326
        %v334 = vmax.f32 %v332, %v327
        %v335 = vmax.f32 %v333, %v329
        %v336 = vmax.f32 %v334, %v330
        %v337 = vsub.f32 %v320, %v335
        %v338 = vsub.f32 %v321, %v336
        %v339 = vmul.f32 %v337, 1.442695
        %v340 = vpow.pop %v339
        %v341 = vmul.f32 %v338, 1.442695
        %v342 = vpow.pop %v341
        %v343 = vsub.f32 %v323, %v335
        %v344 = vsub.f32 %v324, %v336
        %v345 = vmul.f32 %v343, 1.442695
        %v346 = vpow.pop %v345
        %v347 = vmul.f32 %v344, 1.442695
        %v348 = vpow.pop %v347
        %v349 = vsub.f32 %v326, %v335
        %v350 = vsub.f32 %v327, %v336
        %v351 = vmul.f32 %v349, 1.442695
        %v352 = vpow.pop %v351
        %v353 = vmul.f32 %v350, 1.442695
        %v354 = vpow.pop %v353
        %v355 = vsub.f32 %v329, %v335
        %v356 = vsub.f32 %v330, %v336
        %v357 = vmul.f32 %v355, 1.442695
        %v358 = vpow.pop %v357
        %v359 = vmul.f32 %v356, 1.442695
        %v360 = vpow.pop %v359
        %v361 = vadd.f32 %v340, %v346
        %v362 = vadd.f32 %v342, %v348
        %v363 = vadd.f32 %v361, %v352
        %v364 = vadd.f32 %v362, %v354
        %v365 = vadd.f32 %v363, %v358
        %v366 = vadd.f32 %v364, %v360
        %v367 = vrcp.pop %v365
        %v368 = vrcp.pop %v366
        %v369 = vmul.f32 %v365, %v367
        %v370 = vmul.f32 %v366, %v368
        %v371 = vsub.f32 2.0, %v369
        %v372 = vsub.f32 2.0, %v370
        %v373 = vmul.f32 %v367, %v371
        %v374 = vmul.f32 %v368, %v372
        %vm375 = vcmp.ge.s32.totalorder %v318, 0
        %vm376 = vcmp.ge.s32.totalorder %v319, 0
        %v377 = vsel %vm375, %v373, 0.0
        %v378 = vsel %vm376, %v374, 0.0
        %v379 = vmul.f32 %v340, %v377
        %v380 = vmul.f32 %v342, %v378
        %vm381 = vcmp.eq.s32.totalorder %v318, 0
        %vm382 = vcmp.eq.s32.totalorder %v319, 0
        %v383 = vld [vmem:[#allocation2] sm:$0xff]
        %v384 = vld [vmem:[#allocation2 + $0x8] sm:$0xff]
        %v385 = vsel %vm381, %v379, 0.0
        %v386 = vsel %vm382, %v380, 0.0
        %v387 = vadd.f32 %v383, %v385
        %v388 = vadd.f32 %v384, %v386
        %389 = vst [vmem:[#allocation2] sm:$0xff] %v387
        %390 = vst [vmem:[#allocation2 + $0x8] sm:$0xff] %v388
        %v391 = vld [vmem:[#allocation3] sm:$0xff]
        %v392 = vld [vmem:[#allocation3 + $0x8] sm:$0xff]
        %v393 = vadd.f32 %v391, %v379
        %v394 = vadd.f32 %v392, %v380
        %395 = vst [vmem:[#allocation3] sm:$0xff] %v393
        %396 = vst [vmem:[#allocation3 + $0x8] sm:$0xff] %v394
        %v397 = vld [vmem:[#allocation4] sm:$0xff]
        %v398 = vld [vmem:[#allocation4 + $0x8] sm:$0xff]
        %v399 = vsel %vm381, 1.0, 0.0
        %v400 = vsel %vm382, 1.0, 0.0
        %v401 = vadd.f32 %v397, %v399
        %v402 = vadd.f32 %v398, %v400
        %403 = vst [vmem:[#allocation4] sm:$0xff] %v401
        %404 = vst [vmem:[#allocation4 + $0x8] sm:$0xff] %v402
        %v405 = vmul.f32 %v346, %v377
        %v406 = vmul.f32 %v348, %v378
        %vm407 = vcmp.eq.s32.totalorder %v318, 1
        %vm408 = vcmp.eq.s32.totalorder %v319, 1
        %s409 = scalar_lea.vmem [#allocation2], 16
        %v410 = vld [vmem:[%s409] sm:$0xff]
        %v411 = vld [vmem:[%s409 + $0x8] sm:$0xff]
        %v412 = vsel %vm407, %v405, 0.0
        %v413 = vsel %vm408, %v406, 0.0
        %v414 = vadd.f32 %v410, %v412
        %v415 = vadd.f32 %v411, %v413
        %416 = vst [vmem:[%s409] sm:$0xff] %v414
        %417 = vst [vmem:[%s409 + $0x8] sm:$0xff] %v415
        %s418 = scalar_lea.vmem [#allocation3], 16
        %v419 = vld [vmem:[%s418] sm:$0xff]
        %v420 = vld [vmem:[%s418 + $0x8] sm:$0xff]
        %v421 = vadd.f32 %v419, %v405
        %v422 = vadd.f32 %v420, %v406
        %423 = vst [vmem:[%s418] sm:$0xff] %v421
        %424 = vst [vmem:[%s418 + $0x8] sm:$0xff] %v422
        %s425 = scalar_lea.vmem [#allocation4], 16
        %v426 = vld [vmem:[%s425] sm:$0xff]
        %v427 = vld [vmem:[%s425 + $0x8] sm:$0xff]
        %v428 = vsel %vm407, 1.0, 0.0
        %v429 = vsel %vm408, 1.0, 0.0
        %v430 = vadd.f32 %v426, %v428
        %v431 = vadd.f32 %v427, %v429
        %432 = vst [vmem:[%s425] sm:$0xff] %v430
        %433 = vst [vmem:[%s425 + $0x8] sm:$0xff] %v431
        %v434 = vmul.f32 %v352, %v377
        %v435 = vmul.f32 %v354, %v378
        %vm436 = vcmp.eq.s32.totalorder %v318, 2
        %vm437 = vcmp.eq.s32.totalorder %v319, 2
        %s438 = scalar_lea.vmem [#allocation2], 32
        %v439 = vld [vmem:[%s438] sm:$0xff]
        %v440 = vld [vmem:[%s438 + $0x8] sm:$0xff]
        %v441 = vsel %vm436, %v434, 0.0
        %v442 = vsel %vm437, %v435, 0.0
        %v443 = vadd.f32 %v439, %v441
        %v444 = vadd.f32 %v440, %v442
        %445 = vst [vmem:[%s438] sm:$0xff] %v443
        %446 = vst [vmem:[%s438 + $0x8] sm:$0xff] %v444
        %s447 = scalar_lea.vmem [#allocation3], 32
        %v448 = vld [vmem:[%s447] sm:$0xff]
        %v449 = vld [vmem:[%s447 + $0x8] sm:$0xff]
        %v450 = vadd.f32 %v448, %v434
        %v451 = vadd.f32 %v449, %v435
        %452 = vst [vmem:[%s447] sm:$0xff] %v450
        %453 = vst [vmem:[%s447 + $0x8] sm:$0xff] %v451
        %s454 = scalar_lea.vmem [#allocation4], 32
        %v455 = vld [vmem:[%s454] sm:$0xff]
        %v456 = vld [vmem:[%s454 + $0x8] sm:$0xff]
        %v457 = vsel %vm436, 1.0, 0.0
        %v458 = vsel %vm437, 1.0, 0.0
        %v459 = vadd.f32 %v455, %v457
        %v460 = vadd.f32 %v456, %v458
        %461 = vst [vmem:[%s454] sm:$0xff] %v459
        %462 = vst [vmem:[%s454 + $0x8] sm:$0xff] %v460
        %v463 = vmul.f32 %v358, %v377
        %v464 = vmul.f32 %v360, %v378
        %vm465 = vcmp.eq.s32.totalorder %v318, 3
        %vm466 = vcmp.eq.s32.totalorder %v319, 3
        %s467 = scalar_lea.vmem [#allocation2], 48
        %v468 = vld [vmem:[%s467] sm:$0xff]
        %v469 = vld [vmem:[%s467 + $0x8] sm:$0xff]
        %v470 = vsel %vm465, %v463, 0.0
        %v471 = vsel %vm466, %v464, 0.0
        %v472 = vadd.f32 %v468, %v470
        %v473 = vadd.f32 %v469, %v471
        %474 = vst [vmem:[%s467] sm:$0xff] %v472
        %475 = vst [vmem:[%s467 + $0x8] sm:$0xff] %v473
        %s476 = scalar_lea.vmem [#allocation3], 48
        %v477 = vld [vmem:[%s476] sm:$0xff]
        %v478 = vld [vmem:[%s476 + $0x8] sm:$0xff]
        %v479 = vadd.f32 %v477, %v463
        %v480 = vadd.f32 %v478, %v464
        %481 = vst [vmem:[%s476] sm:$0xff] %v479
        %482 = vst [vmem:[%s476 + $0x8] sm:$0xff] %v480
        %s483 = scalar_lea.vmem [#allocation4], 48
        %v484 = vld [vmem:[%s483] sm:$0xff]
        %v485 = vld [vmem:[%s483 + $0x8] sm:$0xff]
        %v486 = vsel %vm465, 1.0, 0.0
        %v487 = vsel %vm466, 1.0, 0.0
        %v488 = vadd.f32 %v484, %v486
        %v489 = vadd.f32 %v485, %v487
        %490 = vst [vmem:[%s483] sm:$0xff] %v488
        %491 = vst [vmem:[%s483 + $0x8] sm:$0xff] %v489
        %p492 = scmp.eq.s32.totalorder %s30, 1
        %p493 = pnand %p492, %p289
        %p494 = pneg %p493
        // Predicated region
        $region41: #{tpu_custom_call.1} parent=27 // pred_check
          _
        $region42: #{tpu_custom_call.1} parent=27 // pred_check_branch
          %496 = sbr.rel (%p493) target = $region44
        $region43: #{tpu_custom_call.1} parent=27 // pred_region
          %v497 = vld [vmem:[#allocation2] sm:$0xff]
          %v498 = vld [vmem:[#allocation2 + $0x8] sm:$0xff]
          %v499 = vrot.slane %v497, 4
          %v500 = vadd.f32 %v497, %v499
          %v501 = vrot.slane %v500, 2
          %v502 = vadd.f32 %v500, %v501
          %v503 = vrot.slane %v502, 1
          %v504 = vadd.f32 %v502, %v503
          %v505 = vrot.slane %v498, 4
          %v506 = vadd.f32 %v498, %v505
          %v507 = vrot.slane %v506, 2
          %v508 = vadd.f32 %v506, %v507
          %v509 = vrot.slane %v508, 1
          %v510 = vadd.f32 %v508, %v509
          %v513 = vcombine.low %v504, %v510
          %v515 = vunpack.c.l.s4 1966171168
          %v516 = vunpack.c.0.s8 %v515
          %v517 = vlaneseq
          %v518 = vshrl.u32 %v517, 7
          %v519 = vsub.s32 %v516, %v518
          %v520 = vrot.slane %v513, %v519
          %v522 = vunpack.c.l.s4 1966171168
          %v523 = vunpack.c.0.s8 %v522
          %v524 = vlaneseq
          %v525 = vshrl.u32 %v524, 7
          %v526 = vsub.s32 %v523, %v525
          %v527 = vrot.slane %v520, %v526
          %v529 = vlaneseq
          %vm530 = vcmp.ge.s32.totalorder %v529, 0
          %vm531 = vcmp.lt.s32.totalorder %v529, 256
          %vm532 = vmand %vm530, %vm531
          %533 = vst.msk [vmem:[#allocation10] sm:$0x3] %vm532, %v527
          %v534 = vld [vmem:[#allocation3] sm:$0xff]
          %v535 = vld [vmem:[#allocation3 + $0x8] sm:$0xff]
          %v536 = vrot.slane %v534, 4
          %v537 = vadd.f32 %v534, %v536
          %v538 = vrot.slane %v537, 2
          %v539 = vadd.f32 %v537, %v538
          %v540 = vrot.slane %v539, 1
          %v541 = vadd.f32 %v539, %v540
          %v542 = vrot.slane %v535, 4
          %v543 = vadd.f32 %v535, %v542
          %v544 = vrot.slane %v543, 2
          %v545 = vadd.f32 %v543, %v544
          %v546 = vrot.slane %v545, 1
          %v547 = vadd.f32 %v545, %v546
          %v550 = vcombine.low %v541, %v547
          %v552 = vunpack.c.l.s4 1966171168
          %v553 = vunpack.c.0.s8 %v552
          %v554 = vlaneseq
          %v555 = vshrl.u32 %v554, 7
          %v556 = vsub.s32 %v553, %v555
          %v557 = vrot.slane %v550, %v556
          %v559 = vunpack.c.l.s4 1966171168
          %v560 = vunpack.c.0.s8 %v559
          %v561 = vlaneseq
          %v562 = vshrl.u32 %v561, 7
          %v563 = vsub.s32 %v560, %v562
          %v564 = vrot.slane %v557, %v563
          %566 = vst.msk [vmem:[#allocation11] sm:$0x3] %vm532, %v564
          %v567 = vld [vmem:[#allocation4] sm:$0xff]
          %v568 = vld [vmem:[#allocation4 + $0x8] sm:$0xff]
          %v569 = vrot.slane %v567, 4
          %v570 = vadd.f32 %v567, %v569
          %v571 = vrot.slane %v570, 2
          %v572 = vadd.f32 %v570, %v571
          %v573 = vrot.slane %v572, 1
          %v574 = vadd.f32 %v572, %v573
          %v575 = vrot.slane %v568, 4
          %v576 = vadd.f32 %v568, %v575
          %v577 = vrot.slane %v576, 2
          %v578 = vadd.f32 %v576, %v577
          %v579 = vrot.slane %v578, 1
          %v580 = vadd.f32 %v578, %v579
          %v583 = vcombine.low %v574, %v580
          %v585 = vunpack.c.l.s4 1966171168
          %v586 = vunpack.c.0.s8 %v585
          %v587 = vlaneseq
          %v588 = vshrl.u32 %v587, 7
          %v589 = vsub.s32 %v586, %v588
          %v590 = vrot.slane %v583, %v589
          %v592 = vunpack.c.l.s4 1966171168
          %v593 = vunpack.c.0.s8 %v592
          %v594 = vlaneseq
          %v595 = vshrl.u32 %v594, 7
          %v596 = vsub.s32 %v593, %v595
          %v597 = vrot.slane %v590, %v596
          %599 = vst.msk [vmem:[#allocation13] sm:$0x3] %vm532, %v597
          %v600 = vld [vmem:[%s409] sm:$0xff]
          %v601 = vld [vmem:[%s409 + $0x8] sm:$0xff]
          %v602 = vrot.slane %v600, 4
          %v603 = vadd.f32 %v600, %v602
          %v604 = vrot.slane %v603, 2
          %v605 = vadd.f32 %v603, %v604
          %v606 = vrot.slane %v605, 1
          %v607 = vadd.f32 %v605, %v606
          %v608 = vrot.slane %v601, 4
          %v609 = vadd.f32 %v601, %v608
          %v610 = vrot.slane %v609, 2
          %v611 = vadd.f32 %v609, %v610
          %v612 = vrot.slane %v611, 1
          %v613 = vadd.f32 %v611, %v612
          %v616 = vcombine.low %v607, %v613
          %v618 = vunpack.c.l.s4 1966171168
          %v619 = vunpack.c.0.s8 %v618
          %v620 = vlaneseq
          %v621 = vshrl.u32 %v620, 7
          %v622 = vsub.s32 %v619, %v621
          %v623 = vrot.slane %v616, %v622
          %v625 = vunpack.c.l.s4 1966171168
          %v626 = vunpack.c.0.s8 %v625
          %v627 = vlaneseq
          %v628 = vshrl.u32 %v627, 7
          %v629 = vsub.s32 %v626, %v628
          %v630 = vrot.slane %v623, %v629
          %s632 = scalar_lea.vmem [#allocation10], 2
          %633 = vst.msk [vmem:[%s632] sm:$0x3] %vm532, %v630
          %v634 = vld [vmem:[%s418] sm:$0xff]
          %v635 = vld [vmem:[%s418 + $0x8] sm:$0xff]
          %v636 = vrot.slane %v634, 4
          %v637 = vadd.f32 %v634, %v636
          %v638 = vrot.slane %v637, 2
          %v639 = vadd.f32 %v637, %v638
          %v640 = vrot.slane %v639, 1
          %v641 = vadd.f32 %v639, %v640
          %v642 = vrot.slane %v635, 4
          %v643 = vadd.f32 %v635, %v642
          %v644 = vrot.slane %v643, 2
          %v645 = vadd.f32 %v643, %v644
          %v646 = vrot.slane %v645, 1
          %v647 = vadd.f32 %v645, %v646
          %v650 = vcombine.low %v641, %v647
          %v652 = vunpack.c.l.s4 1966171168
          %v653 = vunpack.c.0.s8 %v652
          %v654 = vlaneseq
          %v655 = vshrl.u32 %v654, 7
          %v656 = vsub.s32 %v653, %v655
          %v657 = vrot.slane %v650, %v656
          %v659 = vunpack.c.l.s4 1966171168
          %v660 = vunpack.c.0.s8 %v659
          %v661 = vlaneseq
          %v662 = vshrl.u32 %v661, 7
          %v663 = vsub.s32 %v660, %v662
          %v664 = vrot.slane %v657, %v663
          %s666 = scalar_lea.vmem [#allocation11], 2
          %667 = vst.msk [vmem:[%s666] sm:$0x3] %vm532, %v664
          %v668 = vld [vmem:[%s425] sm:$0xff]
          %v669 = vld [vmem:[%s425 + $0x8] sm:$0xff]
          %v670 = vrot.slane %v668, 4
          %v671 = vadd.f32 %v668, %v670
          %v672 = vrot.slane %v671, 2
          %v673 = vadd.f32 %v671, %v672
          %v674 = vrot.slane %v673, 1
          %v675 = vadd.f32 %v673, %v674
          %v676 = vrot.slane %v669, 4
          %v677 = vadd.f32 %v669, %v676
          %v678 = vrot.slane %v677, 2
          %v679 = vadd.f32 %v677, %v678
          %v680 = vrot.slane %v679, 1
          %v681 = vadd.f32 %v679, %v680
          %v684 = vcombine.low %v675, %v681
          %v686 = vunpack.c.l.s4 1966171168
          %v687 = vunpack.c.0.s8 %v686
          %v688 = vlaneseq
          %v689 = vshrl.u32 %v688, 7
          %v690 = vsub.s32 %v687, %v689
          %v691 = vrot.slane %v684, %v690
          %v693 = vunpack.c.l.s4 1966171168
          %v694 = vunpack.c.0.s8 %v693
          %v695 = vlaneseq
          %v696 = vshrl.u32 %v695, 7
          %v697 = vsub.s32 %v694, %v696
          %v698 = vrot.slane %v691, %v697
          %s700 = scalar_lea.vmem [#allocation13], 2
          %701 = vst.msk [vmem:[%s700] sm:$0x3] %vm532, %v698
          %v702 = vld [vmem:[%s438] sm:$0xff]
          %v703 = vld [vmem:[%s438 + $0x8] sm:$0xff]
          %v704 = vrot.slane %v702, 4
          %v705 = vadd.f32 %v702, %v704
          %v706 = vrot.slane %v705, 2
          %v707 = vadd.f32 %v705, %v706
          %v708 = vrot.slane %v707, 1
          %v709 = vadd.f32 %v707, %v708
          %v710 = vrot.slane %v703, 4
          %v711 = vadd.f32 %v703, %v710
          %v712 = vrot.slane %v711, 2
          %v713 = vadd.f32 %v711, %v712
          %v714 = vrot.slane %v713, 1
          %v715 = vadd.f32 %v713, %v714
          %v718 = vcombine.low %v709, %v715
          %v720 = vunpack.c.l.s4 1966171168
          %v721 = vunpack.c.0.s8 %v720
          %v722 = vlaneseq
          %v723 = vshrl.u32 %v722, 7
          %v724 = vsub.s32 %v721, %v723
          %v725 = vrot.slane %v718, %v724
          %v727 = vunpack.c.l.s4 1966171168
          %v728 = vunpack.c.0.s8 %v727
          %v729 = vlaneseq
          %v730 = vshrl.u32 %v729, 7
          %v731 = vsub.s32 %v728, %v730
          %v732 = vrot.slane %v725, %v731
          %s734 = scalar_lea.vmem [#allocation10], 4
          %735 = vst.msk [vmem:[%s734] sm:$0x3] %vm532, %v732
          %v736 = vld [vmem:[%s447] sm:$0xff]
          %v737 = vld [vmem:[%s447 + $0x8] sm:$0xff]
          %v738 = vrot.slane %v736, 4
          %v739 = vadd.f32 %v736, %v738
          %v740 = vrot.slane %v739, 2
          %v741 = vadd.f32 %v739, %v740
          %v742 = vrot.slane %v741, 1
          %v743 = vadd.f32 %v741, %v742
          %v744 = vrot.slane %v737, 4
          %v745 = vadd.f32 %v737, %v744
          %v746 = vrot.slane %v745, 2
          %v747 = vadd.f32 %v745, %v746
          %v748 = vrot.slane %v747, 1
          %v749 = vadd.f32 %v747, %v748
          %v752 = vcombine.low %v743, %v749
          %v754 = vunpack.c.l.s4 1966171168
          %v755 = vunpack.c.0.s8 %v754
          %v756 = vlaneseq
          %v757 = vshrl.u32 %v756, 7
          %v758 = vsub.s32 %v755, %v757
          %v759 = vrot.slane %v752, %v758
          %v761 = vunpack.c.l.s4 1966171168
          %v762 = vunpack.c.0.s8 %v761
          %v763 = vlaneseq
          %v764 = vshrl.u32 %v763, 7
          %v765 = vsub.s32 %v762, %v764
          %v766 = vrot.slane %v759, %v765
          %s768 = scalar_lea.vmem [#allocation11], 4
          %769 = vst.msk [vmem:[%s768] sm:$0x3] %vm532, %v766
          %v770 = vld [vmem:[%s454] sm:$0xff]
          %v771 = vld [vmem:[%s454 + $0x8] sm:$0xff]
          %v772 = vrot.slane %v770, 4
          %v773 = vadd.f32 %v770, %v772
          %v774 = vrot.slane %v773, 2
          %v775 = vadd.f32 %v773, %v774
          %v776 = vrot.slane %v775, 1
          %v777 = vadd.f32 %v775, %v776
          %v778 = vrot.slane %v771, 4
          %v779 = vadd.f32 %v771, %v778
          %v780 = vrot.slane %v779, 2
          %v781 = vadd.f32 %v779, %v780
          %v782 = vrot.slane %v781, 1
          %v783 = vadd.f32 %v781, %v782
          %v786 = vcombine.low %v777, %v783
          %v788 = vunpack.c.l.s4 1966171168
          %v789 = vunpack.c.0.s8 %v788
          %v790 = vlaneseq
          %v791 = vshrl.u32 %v790, 7
          %v792 = vsub.s32 %v789, %v791
          %v793 = vrot.slane %v786, %v792
          %v795 = vunpack.c.l.s4 1966171168
          %v796 = vunpack.c.0.s8 %v795
          %v797 = vlaneseq
          %v798 = vshrl.u32 %v797, 7
          %v799 = vsub.s32 %v796, %v798
          %v800 = vrot.slane %v793, %v799
          %s802 = scalar_lea.vmem [#allocation13], 4
          %803 = vst.msk [vmem:[%s802] sm:$0x3] %vm532, %v800
          %v804 = vld [vmem:[%s467] sm:$0xff]
          %v805 = vld [vmem:[%s467 + $0x8] sm:$0xff]
          %v806 = vrot.slane %v804, 4
          %v807 = vadd.f32 %v804, %v806
          %v808 = vrot.slane %v807, 2
          %v809 = vadd.f32 %v807, %v808
          %v810 = vrot.slane %v809, 1
          %v811 = vadd.f32 %v809, %v810
          %v812 = vrot.slane %v805, 4
          %v813 = vadd.f32 %v805, %v812
          %v814 = vrot.slane %v813, 2
          %v815 = vadd.f32 %v813, %v814
          %v816 = vrot.slane %v815, 1
          %v817 = vadd.f32 %v815, %v816
          %v820 = vcombine.low %v811, %v817
          %v822 = vunpack.c.l.s4 1966171168
          %v823 = vunpack.c.0.s8 %v822
          %v824 = vlaneseq
          %v825 = vshrl.u32 %v824, 7
          %v826 = vsub.s32 %v823, %v825
          %v827 = vrot.slane %v820, %v826
          %v829 = vunpack.c.l.s4 1966171168
          %v830 = vunpack.c.0.s8 %v829
          %v831 = vlaneseq
          %v832 = vshrl.u32 %v831, 7
          %v833 = vsub.s32 %v830, %v832
          %v834 = vrot.slane %v827, %v833
          %s836 = scalar_lea.vmem [#allocation10], 6
          %837 = vst.msk [vmem:[%s836] sm:$0x3] %vm532, %v834
          %v838 = vld [vmem:[%s476] sm:$0xff]
          %v839 = vld [vmem:[%s476 + $0x8] sm:$0xff]
          %v840 = vrot.slane %v838, 4
          %v841 = vadd.f32 %v838, %v840
          %v842 = vrot.slane %v841, 2
          %v843 = vadd.f32 %v841, %v842
          %v844 = vrot.slane %v843, 1
          %v845 = vadd.f32 %v843, %v844
          %v846 = vrot.slane %v839, 4
          %v847 = vadd.f32 %v839, %v846
          %v848 = vrot.slane %v847, 2
          %v849 = vadd.f32 %v847, %v848
          %v850 = vrot.slane %v849, 1
          %v851 = vadd.f32 %v849, %v850
          %v854 = vcombine.low %v845, %v851
          %v856 = vunpack.c.l.s4 1966171168
          %v857 = vunpack.c.0.s8 %v856
          %v858 = vlaneseq
          %v859 = vshrl.u32 %v858, 7
          %v860 = vsub.s32 %v857, %v859
          %v861 = vrot.slane %v854, %v860
          %v863 = vunpack.c.l.s4 1966171168
          %v864 = vunpack.c.0.s8 %v863
          %v865 = vlaneseq
          %v866 = vshrl.u32 %v865, 7
          %v867 = vsub.s32 %v864, %v866
          %v868 = vrot.slane %v861, %v867
          %s870 = scalar_lea.vmem [#allocation11], 6
          %871 = vst.msk [vmem:[%s870] sm:$0x3] %vm532, %v868
          %v872 = vld [vmem:[%s483] sm:$0xff]
          %v873 = vld [vmem:[%s483 + $0x8] sm:$0xff]
          %v874 = vrot.slane %v872, 4
          %v875 = vadd.f32 %v872, %v874
          %v876 = vrot.slane %v875, 2
          %v877 = vadd.f32 %v875, %v876
          %v878 = vrot.slane %v877, 1
          %v879 = vadd.f32 %v877, %v878
          %v880 = vrot.slane %v873, 4
          %v881 = vadd.f32 %v873, %v880
          %v882 = vrot.slane %v881, 2
          %v883 = vadd.f32 %v881, %v882
          %v884 = vrot.slane %v883, 1
          %v885 = vadd.f32 %v883, %v884
          %v888 = vcombine.low %v879, %v885
          %v890 = vunpack.c.l.s4 1966171168
          %v891 = vunpack.c.0.s8 %v890
          %v892 = vlaneseq
          %v893 = vshrl.u32 %v892, 7
          %v894 = vsub.s32 %v891, %v893
          %v895 = vrot.slane %v888, %v894
          %v897 = vunpack.c.l.s4 1966171168
          %v898 = vunpack.c.0.s8 %v897
          %v899 = vlaneseq
          %v900 = vshrl.u32 %v899, 7
          %v901 = vsub.s32 %v898, %v900
          %v902 = vrot.slane %v895, %v901
          %s904 = scalar_lea.vmem [#allocation13], 6
          %905 = vst.msk [vmem:[%s904] sm:$0x3] %vm532, %v902
        $region44: #{tpu_custom_call.1} parent=27 // pred_fallthru
          _
        // Predicated region
        $region45: #{tpu_custom_call.1} parent=27 // pred_check
          %p906 = pneg %p121
        $region46: #{tpu_custom_call.1} parent=27 // pred_check_branch
          %908 = sbr.rel (%p906) target = $region48
        $region47: #{tpu_custom_call.1} parent=27 // pred_region
          %s910 = ssub.s32 128, 128
          %911 = vsyncadd [#allocation7], %s910
          %s912 = smul.addr %s29, 8
          %s913 = smul.addr %s912, 16
          %s914 = scalar_lea.hbm %s2, %s913
          %s915 = sshll.u32 [#allocation10], 4
          %s916 = int_to_ptr.vmem [resolvable:$true] %s915
          %921 = dma.vmem_to_hbm [thread:$0]  %s916, 128, %s914, [#allocation7], 32, 32, 2
        $region48: #{tpu_custom_call.1} parent=27 // pred_fallthru
          _
        // Predicated region
        $region49: #{tpu_custom_call.1} parent=27 // pred_check
          %p922 = pneg %p147
        $region50: #{tpu_custom_call.1} parent=27 // pred_check_branch
          %924 = sbr.rel (%p922) target = $region52
        $region51: #{tpu_custom_call.1} parent=27 // pred_region
          %s926 = ssub.s32 128, 128
          %927 = vsyncadd [#allocation12], %s926
          %s928 = smul.addr %s29, 8
          %s929 = smul.addr %s928, 16
          %s930 = scalar_lea.hbm %s3, %s929
          %s931 = sshll.u32 [#allocation11], 4
          %s932 = int_to_ptr.vmem [resolvable:$true] %s931
          %937 = dma.vmem_to_hbm [thread:$0]  %s932, 128, %s930, [#allocation12], 32, 32, 2
        $region52: #{tpu_custom_call.1} parent=27 // pred_fallthru
          _
        // Predicated region
        $region53: #{tpu_custom_call.1} parent=27 // pred_check
          %p938 = pneg %p173
        $region54: #{tpu_custom_call.1} parent=27 // pred_check_branch
          %940 = sbr.rel (%p938) target = $region56
        $region55: #{tpu_custom_call.1} parent=27 // pred_region
          %s942 = ssub.s32 128, 128
          %943 = vsyncadd [#allocation12], %s942
          %s944 = smul.addr %s29, 8
          %s945 = smul.addr %s944, 16
          %s946 = scalar_lea.hbm %s4, %s945
          %s947 = sshll.u32 [#allocation13], 4
          %s948 = int_to_ptr.vmem [resolvable:$true] %s947
          %953 = dma.vmem_to_hbm [thread:$0]  %s948, 128, %s946, [#allocation12], 32, 32, 2
        $region56: #{tpu_custom_call.1} parent=27 // pred_fallthru
          _
        // Predicated region
        $region57: #{tpu_custom_call.1} parent=27 // pred_check
          %p954 = pneg %p121
        $region58: #{tpu_custom_call.1} parent=27 // pred_check_branch
          %956 = sbr.rel (%p954) target = $region60
        $region59: #{tpu_custom_call.1} parent=27 // pred_region
          %957 = dma.done [#allocation7], 128
        $region60: #{tpu_custom_call.1} parent=27 // pred_fallthru
          _
        // Predicated region
        $region61: #{tpu_custom_call.1} parent=27 // pred_check
          %p958 = pneg %p147
        $region62: #{tpu_custom_call.1} parent=27 // pred_check_branch
          %960 = sbr.rel (%p958) target = $region64
        $region63: #{tpu_custom_call.1} parent=27 // pred_region
          %961 = dma.done [#allocation12], 128
        $region64: #{tpu_custom_call.1} parent=27 // pred_fallthru
          _
        // Predicated region
        $region65: #{tpu_custom_call.1} parent=27 // pred_check
          %p962 = pneg %p173
        $region66: #{tpu_custom_call.1} parent=27 // pred_check_branch
          %964 = sbr.rel (%p962) target = $region68
        $region67: #{tpu_custom_call.1} parent=27 // pred_region
          %965 = dma.done [#allocation12], 128
        $region68: #{tpu_custom_call.1} parent=27 // pred_fallthru
          _
      $region28: #{tpu_custom_call.1} parent=5 // pred_fallthru
        _
      %p966 = scmp.le.s32.totalorder 2, %s19
      // Predicated region
      $region69: #{tpu_custom_call.1} parent=5 // pred_check
        %p967 = pneg %p966
      $region70: #{tpu_custom_call.1} parent=5 // pred_check_branch
        %969 = sbr.rel (%p967) target = $region72
      $region71: #{tpu_custom_call.1} parent=5 // pred_region
        %s970 = ssub.s32 %s19, 2
      $region72: #{tpu_custom_call.1} parent=5 // pred_fallthru
        _
    $region6: #{tpu_custom_call.1} parent=1 // loop_footer
      %s23 = sadd.s32 1, %s19
    $region7: #{tpu_custom_call.1} parent=1 // loop_footer_branch
      %18 = sbr.rel target = $region3
    $region8: #{tpu_custom_call.1} parent=1 // loop_exit
      _
    %971 = vsyncpa [#allocation6], 1
    %s972 = scalar_lea.sflag [#allocation6], 1
    %973 = vsyncpa %s972, 1
    %974 = vsyncpa [#allocation9], 1
    %s975 = scalar_lea.sflag [#allocation9], 1
    %976 = vsyncpa %s975, 1
    %977 = vsyncpa [#allocation7], 1
    %s978 = scalar_lea.sflag [#allocation7], 1
    %979 = vsyncpa %s978, 1
    %980 = vsyncpa [#allocation12], 1

</llo_original>
